<compile_context>
chip_gen: v7x
topology: tpu7x:2x2x1
jax: 0.10.0
libtpu: 0.0.40
codegen_flags: <defaults>
</compile_context>

<pallas_src>
import jax
import jax.numpy as jnp
from jax.experimental import pallas as pl
from jax.experimental.pallas import tpu as pltpu

# ---- problem sizes (derived exactly as in the module, with small consistent dims) ----
NUMBER_OF_USERS = 2
TIME_LENGTH = 4
SIZE_IN = NUMBER_OF_USERS * TIME_LENGTH * NUMBER_OF_USERS * TIME_LENGTH * 2  # 128
SIZE_H1 = SIZE_IN                                                            # 128
NN_OUT_PER_EIGEN = 2 * NUMBER_OF_USERS * TIME_LENGTH + 1                     # 17
NUM_EIGEN = 20
NUM_OUTPUTS = NUM_EIGEN * NN_OUT_PER_EIGEN                                   # 340
SIZE_OUT = 2 * NUM_OUTPUTS                                                   # 680
SIZE_H2 = (SIZE_IN + SIZE_OUT) // 2                                          # 404
SLOPE = 0.1


def _round_up(n, m):
    return ((n + m - 1) // m) * m


# ---- lane-padded (multiple-of-128) internal sizes ----
SIZE_H2_P = _round_up(SIZE_H2, 128)    # 404 -> 512
SIZE_OUT_P = _round_up(SIZE_OUT, 128)  # 680 -> 768

BATCH = 16
MAX_BATCH_TILE = 128                   # batch rows per grid step (multiple of 16)


def _leaky_relu(x, slope=SLOPE):
    return jnp.where(x > 0, x, slope * x)


def mlp_kernel(x_ref, w1_ref, b1_ref, w2_ref, b2_ref, w3_ref, b3_ref, o_ref):
    """Fused 3-layer MLP: 3 bf16 MXU matmuls (f32 accumulate) + VPU LeakyReLU."""
    x = x_ref[...].astype(jnp.bfloat16)                               # in-kernel f32->bf16
    h1 = jnp.dot(x, w1_ref[...], preferred_element_type=jnp.float32) + b1_ref[...]
    h1 = _leaky_relu(h1).astype(jnp.bfloat16)
    h2 = jnp.dot(h1, w2_ref[...], preferred_element_type=jnp.float32) + b2_ref[...]
    h2 = _leaky_relu(h2).astype(jnp.bfloat16)
    o_ref[...] = (
        jnp.dot(h2, w3_ref[...], preferred_element_type=jnp.float32) + b3_ref[...]
    ).astype(o_ref.dtype)


def prepare_params(w1, b1, w2, b2, w3, b3):
    """One-time prep: cast weights to bf16 and zero-pad feature dims to lane multiples.

    Padded b2 lanes are zero -> padded h2 lanes are leaky_relu(0) = 0, and padded W3
    rows/cols are zero, so the extra lanes contribute nothing to the real outputs.
    Call this ONCE and reuse the result across every nnetwork_forward call.
    """
    bf = jnp.bfloat16
    w1p = jnp.asarray(w1, bf)                                         # (128, 128)
    b1p = jnp.asarray(b1, jnp.float32).reshape(1, SIZE_H1)            # (1, 128)
    w2p = jnp.zeros((SIZE_H1, SIZE_H2_P), bf).at[:, :SIZE_H2].set(jnp.asarray(w2, bf))
    b2p = jnp.zeros((1, SIZE_H2_P), jnp.float32).at[:, :SIZE_H2].set(
        jnp.asarray(b2, jnp.float32).reshape(1, SIZE_H2))
    w3p = jnp.zeros((SIZE_H2_P, SIZE_OUT_P), bf).at[:SIZE_H2, :SIZE_OUT].set(
        jnp.asarray(w3, bf))
    b3p = jnp.zeros((1, SIZE_OUT_P), jnp.float32).at[:, :SIZE_OUT].set(
        jnp.asarray(b3, jnp.float32).reshape(1, SIZE_OUT))
    return w1p, b1p, w2p, b2p, w3p, b3p


@jax.jit
def nnetwork_forward(x, params_p):
    """x: (B, SIZE_IN) f32.  params_p: output of prepare_params (padded bf16/f32)."""
    w1p, b1p, w2p, b2p, w3p, b3p = params_p
    B = x.shape[0]

    # Batch tile: multiple of 16 (bf16 sublane packing), capped at MAX_BATCH_TILE so large
    # batches pipeline x/out DMAs under compute while weights stay VMEM-resident.
    tile = _round_up(min(B, MAX_BATCH_TILE), 16)
    b_pad = _round_up(B, tile)
    x_p = x if b_pad == B else jnp.pad(x, ((0, b_pad - B), (0, 0)))
    grid = (b_pad // tile,)

    const2 = lambda i: (0, 0)                                         # weights: resident

    cost = pl.CostEstimate(
        flops=2 * b_pad * (SIZE_IN * SIZE_H1 + SIZE_H1 * SIZE_H2_P + SIZE_H2_P * SIZE_OUT_P),
        transcendentals=0,
        bytes_accessed=(
            b_pad * SIZE_IN * 4                                       # x (f32)
            + sum(int(p.size) * p.dtype.itemsize for p in params_p)   # weights + biases
            + b_pad * SIZE_OUT_P * 4                                  # output (f32)
        ),
    )

    out_p = pl.pallas_call(
        mlp_kernel,
        out_shape=jax.ShapeDtypeStruct((b_pad, SIZE_OUT_P), jnp.float32),
        grid=grid,
        in_specs=[
            pl.BlockSpec((tile, SIZE_IN), lambda i: (i, 0)),          # x tile per step
            pl.BlockSpec((SIZE_IN, SIZE_H1), const2),                 # w1 (resident)
            pl.BlockSpec((1, SIZE_H1), const2),                       # b1
            pl.BlockSpec((SIZE_H1, SIZE_H2_P), const2),               # w2 (resident)
            pl.BlockSpec((1, SIZE_H2_P), const2),                     # b2
            pl.BlockSpec((SIZE_H2_P, SIZE_OUT_P), const2),            # w3 (resident)
            pl.BlockSpec((1, SIZE_OUT_P), const2),                    # b3
        ],
        out_specs=pl.BlockSpec((tile, SIZE_OUT_P), lambda i: (i, 0)),
        compiler_params=pltpu.CompilerParams(dimension_semantics=("parallel",)),
        cost_estimate=cost,
    )(x_p, w1p, b1p, w2p, b2p, w3p, b3p)

    return out_p[:B, :SIZE_OUT]


def init_params(key):
    """Deterministic init matching nn.Linear default: U(-1/sqrt(fan_in), 1/sqrt(fan_in))."""
    ks = jax.random.split(key, 6)

    def linear(kw, kb, fan_in, fan_out):
        bound = 1.0 / (fan_in ** 0.5)
        w = jax.random.uniform(kw, (fan_in, fan_out), jnp.float32, -bound, bound)
        b = jax.random.uniform(kb, (1, fan_out), jnp.float32, -bound, bound)
        return w, b

    w1, b1 = linear(ks[0], ks[1], SIZE_IN, SIZE_H1)
    w2, b2 = linear(ks[2], ks[3], SIZE_H1, SIZE_H2)
    w3, b3 = linear(ks[4], ks[5], SIZE_H2, SIZE_OUT)
    return w1, b1, w2, b2, w3, b3


def reference_forward(x, w1, b1, w2, b2, w3, b3):
    """Pure-JAX reference with the same bf16-rounded operands (f32 accumulation)."""
    bf = lambda a: a.astype(jnp.bfloat16).astype(jnp.float32)
    h1 = _leaky_relu(jnp.dot(bf(x), bf(w1), preferred_element_type=jnp.float32) + b1)
    h2 = _leaky_relu(jnp.dot(bf(h1), bf(w2), preferred_element_type=jnp.float32) + b2)
    return jnp.dot(bf(h2), bf(w3), preferred_element_type=jnp.float32) + b3


if __name__ == "__main__":
    key = jax.random.PRNGKey(0)
    k_x, k_p = jax.random.split(key)
    x = jax.random.normal(k_x, (BATCH, SIZE_IN), jnp.float32)
    params = init_params(k_p)

    # One-time padded bf16 param prep (hoisted out of the per-call path).
    params_p = jax.tree_util.tree_map(jax.block_until_ready, prepare_params(*params))

    out = nnetwork_forward(x, params_p)
    out = jax.block_until_ready(out)

    ref = reference_forward(x, *params)
    assert out.shape == (BATCH, SIZE_OUT), out.shape
    max_err = float(jnp.max(jnp.abs(out - ref)))
    assert jnp.allclose(out, ref, atol=2e-2, rtol=2e-2), max_err
    print("KERNEL_OK")
</pallas_src>

<mosaic_0001>
module attributes {stable_mosaic.version = 11 : i64} {
  func.func @mlp_kernel(%arg0: i32, %arg1: memref<16x128xf32, #tpu.memory_space<vmem>>, %arg2: memref<128x128xbf16, #tpu.memory_space<vmem>>, %arg3: memref<1x128xf32, #tpu.memory_space<vmem>>, %arg4: memref<128x512xbf16, #tpu.memory_space<vmem>>, %arg5: memref<1x512xf32, #tpu.memory_space<vmem>>, %arg6: memref<512x768xbf16, #tpu.memory_space<vmem>>, %arg7: memref<1x768xf32, #tpu.memory_space<vmem>>, %arg8: memref<16x768xf32, #tpu.memory_space<vmem>>) attributes {dimension_semantics = [#tpu.dimension_semantics<parallel>], iteration_bounds = array<i64: 1>, scalar_prefetch = 0 : i64, scratch_operands = 0 : i64, tpu.core_type = #tpu.core_type<tc>, window_params = [{transform_indices = @transform_0, window_bounds = array<i64: 16, 128>}, {pipeline_mode = #tpu.pipeline_mode<synchronous>, transform_indices = @transform_1, window_bounds = array<i64: 128, 128>}, {pipeline_mode = #tpu.pipeline_mode<synchronous>, transform_indices = @transform_2, window_bounds = array<i64: 1, 128>}, {pipeline_mode = #tpu.pipeline_mode<synchronous>, transform_indices = @transform_3, window_bounds = array<i64: 128, 512>}, {pipeline_mode = #tpu.pipeline_mode<synchronous>, transform_indices = @transform_4, window_bounds = array<i64: 1, 512>}, {pipeline_mode = #tpu.pipeline_mode<synchronous>, transform_indices = @transform_5, window_bounds = array<i64: 512, 768>}, {pipeline_mode = #tpu.pipeline_mode<synchronous>, transform_indices = @transform_6, window_bounds = array<i64: 1, 768>}, {transform_indices = @transform_7, window_bounds = array<i64: 16, 768>}]} {
    %c0 = arith.constant 0 : index
    %c0_0 = arith.constant 0 : index
    %0 = vector.load %arg1[%c0, %c0_0] : memref<16x128xf32, #tpu.memory_space<vmem>>, vector<16x128xf32>
    %1 = arith.truncf %0 : vector<16x128xf32> to vector<16x128xbf16>
    %c0_1 = arith.constant 0 : index
    %c0_2 = arith.constant 0 : index
    %2 = vector.load %arg2[%c0_1, %c0_2] : memref<128x128xbf16, #tpu.memory_space<vmem>>, vector<128x128xbf16>
    %cst = arith.constant dense<0.000000e+00> : vector<16x128xf32>
    %3 = tpu.matmul %1, %2, %cst {dimension_numbers = #tpu.dot_dimension_numbers<[1], [0], [0], [1], [0, 0, 1, 1], [], []>} : vector<16x128xbf16>, vector<128x128xbf16>, vector<16x128xf32> -> vector<16x128xf32>
    %c0_3 = arith.constant 0 : index
    %c0_4 = arith.constant 0 : index
    %4 = vector.load %arg3[%c0_3, %c0_4] : memref<1x128xf32, #tpu.memory_space<vmem>>, vector<1x128xf32>
    %5 = vector.broadcast %4 : vector<1x128xf32> to vector<16x128xf32>
    %6 = arith.addf %3, %5 : vector<16x128xf32>
    %cst_5 = arith.constant 0.000000e+00 : f32
    %7 = vector.broadcast %cst_5 : f32 to vector<16x128xf32>
    %8 = arith.cmpf ogt, %6, %7 : vector<16x128xf32>
    %cst_6 = arith.constant 1.000000e-01 : f32
    %9 = vector.broadcast %cst_6 : f32 to vector<16x128xf32>
    %10 = arith.mulf %9, %6 : vector<16x128xf32>
    %11 = arith.select %8, %6, %10 : vector<16x128xi1>, vector<16x128xf32>
    %12 = arith.truncf %11 : vector<16x128xf32> to vector<16x128xbf16>
    %c0_7 = arith.constant 0 : index
    %c0_8 = arith.constant 0 : index
    %13 = vector.load %arg4[%c0_7, %c0_8] : memref<128x512xbf16, #tpu.memory_space<vmem>>, vector<128x512xbf16>
    %cst_9 = arith.constant dense<0.000000e+00> : vector<16x512xf32>
    %14 = tpu.matmul %12, %13, %cst_9 {dimension_numbers = #tpu.dot_dimension_numbers<[1], [0], [0], [1], [0, 0, 1, 1], [], []>} : vector<16x128xbf16>, vector<128x512xbf16>, vector<16x512xf32> -> vector<16x512xf32>
    %c0_10 = arith.constant 0 : index
    %c0_11 = arith.constant 0 : index
    %15 = vector.load %arg5[%c0_10, %c0_11] : memref<1x512xf32, #tpu.memory_space<vmem>>, vector<1x512xf32>
    %16 = vector.broadcast %15 : vector<1x512xf32> to vector<16x512xf32>
    %17 = arith.addf %14, %16 : vector<16x512xf32>
    %cst_12 = arith.constant 0.000000e+00 : f32
    %18 = vector.broadcast %cst_12 : f32 to vector<16x512xf32>
    %19 = arith.cmpf ogt, %17, %18 : vector<16x512xf32>
    %cst_13 = arith.constant 1.000000e-01 : f32
    %20 = vector.broadcast %cst_13 : f32 to vector<16x512xf32>
    %21 = arith.mulf %20, %17 : vector<16x512xf32>
    %22 = arith.select %19, %17, %21 : vector<16x512xi1>, vector<16x512xf32>
    %23 = arith.truncf %22 : vector<16x512xf32> to vector<16x512xbf16>
    %c0_14 = arith.constant 0 : index
    %c0_15 = arith.constant 0 : index
    %24 = vector.load %arg6[%c0_14, %c0_15] : memref<512x768xbf16, #tpu.memory_space<vmem>>, vector<512x768xbf16>
    %cst_16 = arith.constant dense<0.000000e+00> : vector<16x768xf32>
    %25 = tpu.matmul %23, %24, %cst_16 {dimension_numbers = #tpu.dot_dimension_numbers<[1], [0], [0], [1], [0, 0, 1, 1], [], []>} : vector<16x512xbf16>, vector<512x768xbf16>, vector<16x768xf32> -> vector<16x768xf32>
    %c0_17 = arith.constant 0 : index
    %c0_18 = arith.constant 0 : index
    %26 = vector.load %arg7[%c0_17, %c0_18] : memref<1x768xf32, #tpu.memory_space<vmem>>, vector<1x768xf32>
    %27 = vector.broadcast %26 : vector<1x768xf32> to vector<16x768xf32>
    %28 = arith.addf %25, %27 : vector<16x768xf32>
    %c0_19 = arith.constant 0 : index
    %c0_20 = arith.constant 0 : index
    %29 = vector.load %arg8[%c0_19, %c0_20] : memref<16x768xf32, #tpu.memory_space<vmem>>, vector<16x768xf32>
    tpu.vector_store %arg8[%c0_19, %c0_20], %28 {strides = array<i32>} : memref<16x768xf32, #tpu.memory_space<vmem>>, vector<16x768xf32>,
    return
  }
  func.func @transform_0(%arg0: i32) -> (i32, i32) {
    %c0_i32 = arith.constant 0 : i32
    %c0_i32_0 = arith.constant 0 : i32
    return %arg0, %c0_i32 : i32, i32
  }
  func.func @transform_1(%arg0: i32) -> (i32, i32) {
    %c0_i32 = arith.constant 0 : i32
    %c0_i32_0 = arith.constant 0 : i32
    %c0_i32_1 = arith.constant 0 : i32
    return %c0_i32, %c0_i32_0 : i32, i32
  }
  func.func @transform_2(%arg0: i32) -> (i32, i32) {
    %c0_i32 = arith.constant 0 : i32
    %c0_i32_0 = arith.constant 0 : i32
    %c0_i32_1 = arith.constant 0 : i32
    return %c0_i32, %c0_i32_0 : i32, i32
  }
  func.func @transform_3(%arg0: i32) -> (i32, i32) {
    %c0_i32 = arith.constant 0 : i32
    %c0_i32_0 = arith.constant 0 : i32
    %c0_i32_1 = arith.constant 0 : i32
    return %c0_i32, %c0_i32_0 : i32, i32
  }
  func.func @transform_4(%arg0: i32) -> (i32, i32) {
    %c0_i32 = arith.constant 0 : i32
    %c0_i32_0 = arith.constant 0 : i32
    %c0_i32_1 = arith.constant 0 : i32
    return %c0_i32, %c0_i32_0 : i32, i32
  }
  func.func @transform_5(%arg0: i32) -> (i32, i32) {
    %c0_i32 = arith.constant 0 : i32
    %c0_i32_0 = arith.constant 0 : i32
    %c0_i32_1 = arith.constant 0 : i32
    return %c0_i32, %c0_i32_0 : i32, i32
  }
  func.func @transform_6(%arg0: i32) -> (i32, i32) {
    %c0_i32 = arith.constant 0 : i32
    %c0_i32_0 = arith.constant 0 : i32
    %c0_i32_1 = arith.constant 0 : i32
    return %c0_i32, %c0_i32_0 : i32, i32
  }
  func.func @transform_7(%arg0: i32) -> (i32, i32) {
    %c0_i32 = arith.constant 0 : i32
    %c0_i32_0 = arith.constant 0 : i32
    return %arg0, %c0_i32 : i32, i32
  }
}

</mosaic_0001>

<llo_original>
// kernel: nnetwork_forward.1
$region0: #{nnetwork_forward.1}
  #allocation0 [shape = 'u32[]', space=smem, size = 0x4, offset = 0x4, fixed_abs, tag = 'smem constant byte address 0x4 - core index']
  #allocation1 [shape = 'u32[144,128]{1,0:T(1,128)}', space=vmem, size = 0x12000, scoped, tag = 'internal scratch']
  %s0 = inlined_call_operand.hbm [shape: f32[16,128], index: 0, kind: input, shape index: {}]
  %s1 = inlined_call_operand.hbm [shape: bf16[128,128], index: 1, kind: input, shape index: {}]
  %s2 = inlined_call_operand.vmem [shape: f32[1,128], index: 2, kind: input, shape index: {}]
  %s3 = inlined_call_operand.hbm [shape: bf16[128,512], index: 3, kind: input, shape index: {}]
  %s4 = inlined_call_operand.vmem [shape: f32[1,512], index: 4, kind: input, shape index: {}]
  %s5 = inlined_call_operand.hbm [shape: bf16[512,768], index: 5, kind: input, shape index: {}]
  %s6 = inlined_call_operand.vmem [shape: f32[1,768], index: 6, kind: input, shape index: {}]
  %s7 = inlined_call_operand.hbm [shape: f32[16,768], index: 7, kind: output, shape index: {}]
  %s8 = sld [smem:[#allocation0]]
  $region54: #{nnetwork_forward.1} parent=0
    _
  %s10 = ssub.s32 1, %s8
  %s11 = scalar_select 0, %s10, %s8
  $region1: #{nnetwork_forward.1} parent=0
    #allocation2 [shape = 'u8[8192]{0}', space=vmem, size = 0x2000, scoped, tag = 'input window, operand 0, single buffered']
    #allocation3 [shape = 's32[1]{0}', space=sflag, size = 0x4, scoped, tag = 'scoped memory for nnetwork_forward.1']
    #allocation4 [shape = 's32[1]{0}', space=sflag, size = 0x4, scoped, tag = 'scoped memory for nnetwork_forward.1']
    #allocation5 [shape = 'u8[32768]{0}', space=vmem, size = 0x8000, scoped, tag = 'input window, operand 1, single buffered']
    #allocation6 [shape = 's32[1]{0}', space=sflag, size = 0x4, scoped, tag = 'scoped memory for nnetwork_forward.1']
    #allocation7 [shape = 'u8[131072]{0}', space=vmem, size = 0x20000, scoped, tag = 'input window, operand 3, single buffered']
    #allocation8 [shape = 'u8[786432]{0}', space=vmem, size = 0xc0000, scoped, tag = 'input window, operand 5, single buffered']
    #allocation9 [shape = 's32[1]{0}', space=sflag, size = 0x4, scoped, tag = 'scoped memory for nnetwork_forward.1']
    #allocation10 [shape = 'u8[49152]{0}', space=vmem, size = 0xc000, scoped, tag = 'output window, operand 0, single buffered']
    %12 = vsyncpa [#allocation3], 0
    %13 = vsyncpa [#allocation6], 0
    %14 = vsyncpa [#allocation9], 0
    %15 = vsyncpa [#allocation4], 0
    // Predicated region
    $region2: #{nnetwork_forward.1} parent=1 // pred_check
      _
    $region3: #{nnetwork_forward.1} parent=1 // pred_check_branch
      %17 = sbr.rel (0) target = $region5
    $region4: #{nnetwork_forward.1} parent=1 // pred_region
      %s19 = ssub.s32 256, 256
      %20 = vsyncadd [#allocation3], %s19
      %s21 = sshll.u32 [#allocation2], 4
      %s22 = int_to_ptr.vmem [resolvable:$true] %s21
      %27 = dma.hbm_to_vmem [thread:$0]  %s0, 256, %s22, [#allocation3], 128, 128, 8
    $region5: #{nnetwork_forward.1} parent=1 // pred_fallthru
      _
    // Predicated region
    $region6: #{nnetwork_forward.1} parent=1 // pred_check
      _
    $region7: #{nnetwork_forward.1} parent=1 // pred_check_branch
      %29 = sbr.rel (0) target = $region9
    $region8: #{nnetwork_forward.1} parent=1 // pred_region
      %s31 = ssub.s32 1024, 1024
      %32 = vsyncadd [#allocation6], %s31
      %s33 = sshll.u32 [#allocation5], 4
      %s34 = int_to_ptr.vmem [resolvable:$true] %s33
      %39 = dma.hbm_to_vmem [thread:$0]  %s1, 1024, %s34, [#allocation6], 64, 64, 4
    $region9: #{nnetwork_forward.1} parent=1 // pred_fallthru
      _
    // Predicated region
    $region10: #{nnetwork_forward.1} parent=1 // pred_check
      _
    $region11: #{nnetwork_forward.1} parent=1 // pred_check_branch
      %41 = sbr.rel (0) target = $region13
    $region12: #{nnetwork_forward.1} parent=1 // pred_region
      _
    $region13: #{nnetwork_forward.1} parent=1 // pred_fallthru
      _
    // Predicated region
    $region14: #{nnetwork_forward.1} parent=1 // pred_check
      _
    $region15: #{nnetwork_forward.1} parent=1 // pred_check_branch
      %43 = sbr.rel (0) target = $region17
    $region16: #{nnetwork_forward.1} parent=1 // pred_region
      %s45 = ssub.s32 4096, 4096
      %46 = vsyncadd [#allocation6], %s45
      %s47 = sshll.u32 [#allocation7], 4
      %s48 = int_to_ptr.vmem [resolvable:$true] %s47
      %53 = dma.hbm_to_vmem [thread:$0]  %s3, 4096, %s48, [#allocation6], 256, 256, 16
    $region17: #{nnetwork_forward.1} parent=1 // pred_fallthru
      _
    // Predicated region
    $region18: #{nnetwork_forward.1} parent=1 // pred_check
      _
    $region19: #{nnetwork_forward.1} parent=1 // pred_check_branch
      %55 = sbr.rel (0) target = $region21
    $region20: #{nnetwork_forward.1} parent=1 // pred_region
      _
    $region21: #{nnetwork_forward.1} parent=1 // pred_fallthru
      _
    // Predicated region
    $region22: #{nnetwork_forward.1} parent=1 // pred_check
      _
    $region23: #{nnetwork_forward.1} parent=1 // pred_check_branch
      %57 = sbr.rel (0) target = $region25
    $region24: #{nnetwork_forward.1} parent=1 // pred_region
      %s59 = ssub.s32 24576, 24576
      %60 = vsyncadd [#allocation9], %s59
      %s61 = sshll.u32 [#allocation8], 4
      %s62 = int_to_ptr.vmem [resolvable:$true] %s61
      %67 = dma.hbm_to_vmem [thread:$0]  %s5, 24576, %s62, [#allocation9], 384, 384, 24
    $region25: #{nnetwork_forward.1} parent=1 // pred_fallthru
      _
    // Predicated region
    $region26: #{nnetwork_forward.1} parent=1 // pred_check
      _
    $region27: #{nnetwork_forward.1} parent=1 // pred_check_branch
      %69 = sbr.rel (0) target = $region29
    $region28: #{nnetwork_forward.1} parent=1 // pred_region
      _
    $region29: #{nnetwork_forward.1} parent=1 // pred_fallthru
      _
    // Predicated region
    $region30: #{nnetwork_forward.1} parent=1 // pred_check
      _
    $region31: #{nnetwork_forward.1} parent=1 // pred_check_branch
      %71 = sbr.rel (0) target = $region33
    $region32: #{nnetwork_forward.1} parent=1 // pred_region
      %72 = dma.done [#allocation3], 256
    $region33: #{nnetwork_forward.1} parent=1 // pred_fallthru
      _
    // Predicated region
    $region34: #{nnetwork_forward.1} parent=1 // pred_check
      _
    $region35: #{nnetwork_forward.1} parent=1 // pred_check_branch
      %74 = sbr.rel (0) target = $region37
    $region36: #{nnetwork_forward.1} parent=1 // pred_region
      %75 = dma.done [#allocation6], 1024
    $region37: #{nnetwork_forward.1} parent=1 // pred_fallthru
      _
    // Predicated region
    $region38: #{nnetwork_forward.1} parent=1 // pred_check
      _
    $region39: #{nnetwork_forward.1} parent=1 // pred_check_branch
      %77 = sbr.rel (0) target = $region41
    $region40: #{nnetwork_forward.1} parent=1 // pred_region
      %78 = dma.done [#allocation6], 4096
    $region41: #{nnetwork_forward.1} parent=1 // pred_fallthru
      _
    // Predicated region
    $region42: #{nnetwork_forward.1} parent=1 // pred_check
      _
    $region43: #{nnetwork_forward.1} parent=1 // pred_check_branch
      %80 = sbr.rel (0) target = $region45
    $region44: #{nnetwork_forward.1} parent=1 // pred_region
      %81 = dma.done [#allocation9], 24576
    $region45: #{nnetwork_forward.1} parent=1 // pred_fallthru
      _
    %v83 = vld [vmem:[#allocation2] sm:$0xff]
    %v84 = vld [vmem:[#allocation2 + $0x8] sm:$0xff]
    %v85 = vpack.c.bf16 %v84, %v83
    %v86 = vld [vmem:[#allocation5] sm:$0xf]
    %v87 = vld [vmem:[#allocation5 + $0x4] sm:$0xf]
    %v88 = vld [vmem:[#allocation5 + $0x8] sm:$0xf]
    %v89 = vld [vmem:[#allocation5 + $0xc] sm:$0xf]
    %v90 = vld [vmem:[#allocation5 + $0x10] sm:$0xf]
    %v91 = vld [vmem:[#allocation5 + $0x14] sm:$0xf]
    %v92 = vld [vmem:[#allocation5 + $0x18] sm:$0xf]
    %v93 = vld [vmem:[#allocation5 + $0x1c] sm:$0xf]
    %v94 = vld [vmem:[#allocation5 + $0x20] sm:$0xf]
    %v95 = vld [vmem:[#allocation5 + $0x24] sm:$0xf]
    %v96 = vld [vmem:[#allocation5 + $0x28] sm:$0xf]
    %v97 = vld [vmem:[#allocation5 + $0x2c] sm:$0xf]
    %v98 = vld [vmem:[#allocation5 + $0x30] sm:$0xf]
    %v99 = vld [vmem:[#allocation5 + $0x34] sm:$0xf]
    %v100 = vld [vmem:[#allocation5 + $0x38] sm:$0xf]
    %v101 = vld [vmem:[#allocation5 + $0x3c] sm:$0xf]
    %v102 = vld [vmem:[%s2] sm:$0x1]
    %v104 = vlaneseq
    %v105 = vshrl.u32 %v104, 7
    %v106 = vsub.s32 0, %v105
    %v107 = vrot.slane %v102, %v106
    %v125 = vunpack.c.l.b16 %v86
    %v126 = vunpack.c.l.b16 %v87
    %v127 = vunpack.c.l.b16 %v88
    %v128 = vunpack.c.l.b16 %v89
    %v129 = vunpack.c.l.b16 %v90
    %v130 = vunpack.c.l.b16 %v91
    %v131 = vunpack.c.l.b16 %v92
    %v132 = vunpack.c.l.b16 %v93
    %v133 = vunpack.c.l.b16 %v94
    %v134 = vunpack.c.l.b16 %v95
    %v135 = vunpack.c.l.b16 %v96
    %v136 = vunpack.c.l.b16 %v97
    %v137 = vunpack.c.l.b16 %v98
    %v138 = vunpack.c.l.b16 %v99
    %v139 = vunpack.c.l.b16 %v100
    %v140 = vunpack.c.l.b16 %v101
    %v141 = vpack.c.b16 %v126, %v125
    %v142 = vpack.c.b16 %v128, %v127
    %v143 = vpack.c.b16 %v130, %v129
    %v144 = vpack.c.b16 %v132, %v131
    %v145 = vpack.c.b16 %v134, %v133
    %v146 = vpack.c.b16 %v136, %v135
    %v147 = vpack.c.b16 %v138, %v137
    %v148 = vpack.c.b16 %v140, %v139
    %157 = vmatprep.subr.bf16.mxu0 0
    %158 = vmatpush1.bf16.msra.mxu0 %v141
    %159 = vmatprep.subr.bf16.mxu0 0
    %160 = vmatpush1.bf16.msra.mxu0 %v142
    %161 = vmatprep.subr.bf16.mxu0 0
    %162 = vmatpush1.bf16.msra.mxu0 %v143
    %163 = vmatprep.subr.bf16.mxu0 0
    %164 = vmatpush1.bf16.msra.mxu0 %v144
    %165 = vmatprep.subr.bf16.mxu0 0
    %166 = vmatpush1.bf16.msra.mxu0 %v145
    %167 = vmatprep.subr.bf16.mxu0 0
    %168 = vmatpush1.bf16.msra.mxu0 %v146
    %169 = vmatprep.subr.bf16.mxu0 0
    %170 = vmatpush1.bf16.msra.mxu0 %v147
    %171 = vmatprep.subr.bf16.mxu0 0
    %172 = vmatpush1.bf16.msra.mxu0 %v148
    %173 = vmatprep.subr.bf16.mxu0 0
    %174 = vmatpush1.bf16.msra.mxu0 0
    %175 = vmatprep.subr.bf16.mxu0 0
    %176 = vmatpush1.bf16.msra.mxu0 0
    %177 = vmatprep.subr.bf16.mxu0 0
    %178 = vmatpush1.bf16.msra.mxu0 0
    %179 = vmatprep.subr.bf16.mxu0 0
    %180 = vmatpush1.bf16.msra.mxu0 0
    %181 = vmatprep.subr.bf16.mxu0 0
    %182 = vmatpush1.bf16.msra.mxu0 0
    %183 = vmatprep.subr.bf16.mxu0 0
    %184 = vmatpush1.bf16.msra.mxu0 0
    %185 = vmatprep.subr.bf16.mxu0 0
    %186 = vmatpush1.bf16.msra.mxu0 0
    %187 = vmatprep.subr.bf16.mxu0 0
    %188 = vmatpush1.bf16.msra.mxu0 0
    %189 = vmatprep.mubr.bf16.mxu0 0
    %190 = vmatmul.mubr.bf16.gmra.mrb[0].mxu0 %v85
    %v191 = vpop.f32.mrb[0].mxu0
    %v192 = vadd.f32 %v107, %v191
    %v193 = vpop.f32.mrb[0].mxu0
    %v194 = vpop.f32.mrb[0].mxu0
    %v195 = vadd.f32 %v107, %v194
    %v196 = vpop.f32.mrb[0].mxu0
    %197 = vdwg.mxu0
    %vm198 = vcmp.gt.f32.partialorder %v192, 0.0
    %vm199 = vcmp.gt.f32.partialorder %v195, 0.0
    %v200 = vmul.f32 %v192, 0.1
    %v201 = vmul.f32 %v195, 0.1
    %v202 = vsel %vm198, %v192, %v200
    %v203 = vsel %vm199, %v195, %v201
    %v204 = vpack.c.bf16 %v203, %v202
    %v205 = vld [vmem:[#allocation7] sm:$0xff]
    %v206 = vld [vmem:[#allocation7 + $0x8] sm:$0xff]
    %v207 = vld [vmem:[#allocation7 + $0x10] sm:$0xff]
    %v208 = vld [vmem:[#allocation7 + $0x18] sm:$0xff]
    %v209 = vld [vmem:[#allocation7 + $0x20] sm:$0xff]
    %v210 = vld [vmem:[#allocation7 + $0x28] sm:$0xff]
    %v211 = vld [vmem:[#allocation7 + $0x30] sm:$0xff]
    %v212 = vld [vmem:[#allocation7 + $0x38] sm:$0xff]
    %v213 = vld [vmem:[#allocation7 + $0x40] sm:$0xff]
    %v214 = vld [vmem:[#allocation7 + $0x48] sm:$0xff]
    %v215 = vld [vmem:[#allocation7 + $0x50] sm:$0xff]
    %v216 = vld [vmem:[#allocation7 + $0x58] sm:$0xff]
    %v217 = vld [vmem:[#allocation7 + $0x60] sm:$0xff]
    %v218 = vld [vmem:[#allocation7 + $0x68] sm:$0xff]
    %v219 = vld [vmem:[#allocation7 + $0x70] sm:$0xff]
    %v220 = vld [vmem:[#allocation7 + $0x78] sm:$0xff]
    %v221 = vld [vmem:[#allocation7 + $0x80] sm:$0xff]
    %v222 = vld [vmem:[#allocation7 + $0x88] sm:$0xff]
    %v223 = vld [vmem:[#allocation7 + $0x90] sm:$0xff]
    %v224 = vld [vmem:[#allocation7 + $0x98] sm:$0xff]
    %v225 = vld [vmem:[#allocation7 + $0xa0] sm:$0xff]
    %v226 = vld [vmem:[#allocation7 + $0xa8] sm:$0xff]
    %v227 = vld [vmem:[#allocation7 + $0xb0] sm:$0xff]
    %v228 = vld [vmem:[#allocation7 + $0xb8] sm:$0xff]
    %v229 = vld [vmem:[#allocation7 + $0xc0] sm:$0xff]
    %v230 = vld [vmem:[#allocation7 + $0xc8] sm:$0xff]
    %v231 = vld [vmem:[#allocation7 + $0xd0] sm:$0xff]
    %v232 = vld [vmem:[#allocation7 + $0xd8] sm:$0xff]
    %v233 = vld [vmem:[#allocation7 + $0xe0] sm:$0xff]
    %v234 = vld [vmem:[#allocation7 + $0xe8] sm:$0xff]
    %v235 = vld [vmem:[#allocation7 + $0xf0] sm:$0xff]
    %v236 = vld [vmem:[#allocation7 + $0xf8] sm:$0xff]
    %v237 = vld [vmem:[%s4] sm:$0xf]
    %v239 = vlaneseq
    %v240 = vshrl.u32 %v239, 7
    %v241 = vsub.s32 0, %v240
    %v242 = vrot.slane %v237, %v241
    %v243 = vlaneseq
    %v244 = vshrl.u32 %v243, 7
    %v245 = vsub.s32 1, %v244
    %v246 = vrot.slane %v237, %v245
    %v247 = vlaneseq
    %v248 = vshrl.u32 %v247, 7
    %v249 = vsub.s32 2, %v248
    %v250 = vrot.slane %v237, %v249
    %v251 = vlaneseq
    %v252 = vshrl.u32 %v251, 7
    %v253 = vsub.s32 3, %v252
    %v254 = vrot.slane %v237, %v253
    %v291 = vunpack.c.l.b16 %v205
    %v292 = vunpack.c.h.b16 %v205
    %v293 = vunpack.c.l.b16 %v206
    %v294 = vunpack.c.h.b16 %v206
    %v295 = vunpack.c.l.b16 %v207
    %v296 = vunpack.c.h.b16 %v207
    %v297 = vunpack.c.l.b16 %v208
    %v298 = vunpack.c.h.b16 %v208
    %v299 = vunpack.c.l.b16 %v209
    %v300 = vunpack.c.h.b16 %v209
    %v301 = vunpack.c.l.b16 %v210
    %v302 = vunpack.c.h.b16 %v210
    %v303 = vunpack.c.l.b16 %v211
    %v304 = vunpack.c.h.b16 %v211
    %v305 = vunpack.c.l.b16 %v212
    %v306 = vunpack.c.h.b16 %v212
    %v307 = vunpack.c.l.b16 %v213
    %v308 = vunpack.c.h.b16 %v213
    %v309 = vunpack.c.l.b16 %v214
    %v310 = vunpack.c.h.b16 %v214
    %v311 = vunpack.c.l.b16 %v215
    %v312 = vunpack.c.h.b16 %v215
    %v313 = vunpack.c.l.b16 %v216
    %v314 = vunpack.c.h.b16 %v216
    %v315 = vunpack.c.l.b16 %v217
    %v316 = vunpack.c.h.b16 %v217
    %v317 = vunpack.c.l.b16 %v218
    %v318 = vunpack.c.h.b16 %v218
    %v319 = vunpack.c.l.b16 %v219
    %v320 = vunpack.c.h.b16 %v219
    %v321 = vunpack.c.l.b16 %v220
    %v322 = vunpack.c.h.b16 %v220
    %v323 = vunpack.c.l.b16 %v221
    %v324 = vunpack.c.h.b16 %v221
    %v325 = vunpack.c.l.b16 %v222
    %v326 = vunpack.c.h.b16 %v222
    %v327 = vunpack.c.l.b16 %v223
    %v328 = vunpack.c.h.b16 %v223
    %v329 = vunpack.c.l.b16 %v224
    %v330 = vunpack.c.h.b16 %v224
    %v331 = vunpack.c.l.b16 %v225
    %v332 = vunpack.c.h.b16 %v225
    %v333 = vunpack.c.l.b16 %v226
    %v334 = vunpack.c.h.b16 %v226
    %v335 = vunpack.c.l.b16 %v227
    %v336 = vunpack.c.h.b16 %v227
    %v337 = vunpack.c.l.b16 %v228
    %v338 = vunpack.c.h.b16 %v228
    %v339 = vunpack.c.l.b16 %v229
    %v340 = vunpack.c.h.b16 %v229
    %v341 = vunpack.c.l.b16 %v230
    %v342 = vunpack.c.h.b16 %v230
    %v343 = vunpack.c.l.b16 %v231
    %v344 = vunpack.c.h.b16 %v231
    %v345 = vunpack.c.l.b16 %v232
    %v346 = vunpack.c.h.b16 %v232
    %v347 = vunpack.c.l.b16 %v233
    %v348 = vunpack.c.h.b16 %v233
    %v349 = vunpack.c.l.b16 %v234
    %v350 = vunpack.c.h.b16 %v234
    %v351 = vunpack.c.l.b16 %v235
    %v352 = vunpack.c.h.b16 %v235
    %v353 = vunpack.c.l.b16 %v236
    %v354 = vunpack.c.h.b16 %v236
    %v355 = vpack.c.b16 %v295, %v291
    %v356 = vpack.c.b16 %v296, %v292
    %v357 = vpack.c.b16 %v297, %v293
    %v358 = vpack.c.b16 %v298, %v294
    %v359 = vpack.c.b16 %v303, %v299
    %v360 = vpack.c.b16 %v304, %v300
    %v361 = vpack.c.b16 %v305, %v301
    %v362 = vpack.c.b16 %v306, %v302
    %v363 = vpack.c.b16 %v311, %v307
    %v364 = vpack.c.b16 %v312, %v308
    %v365 = vpack.c.b16 %v313, %v309
    %v366 = vpack.c.b16 %v314, %v310
    %v367 = vpack.c.b16 %v319, %v315
    %v368 = vpack.c.b16 %v320, %v316
    %v369 = vpack.c.b16 %v321, %v317
    %v370 = vpack.c.b16 %v322, %v318
    %v371 = vpack.c.b16 %v327, %v323
    %v372 = vpack.c.b16 %v328, %v324
    %v373 = vpack.c.b16 %v329, %v325
    %v374 = vpack.c.b16 %v330, %v326
    %v375 = vpack.c.b16 %v335, %v331
    %v376 = vpack.c.b16 %v336, %v332
    %v377 = vpack.c.b16 %v337, %v333
    %v378 = vpack.c.b16 %v338, %v334
    %v379 = vpack.c.b16 %v343, %v339
    %v380 = vpack.c.b16 %v344, %v340
    %v381 = vpack.c.b16 %v345, %v341
    %v382 = vpack.c.b16 %v346, %v342
    %v383 = vpack.c.b16 %v351, %v347
    %v384 = vpack.c.b16 %v352, %v348
    %v385 = vpack.c.b16 %v353, %v349
    %v386 = vpack.c.b16 %v354, %v350
    %419 = vmatprep.subr.bf16.mxu0 %v356
    %420 = vmatpush1.bf16.msra.mxu0 %v355
    %421 = vmatprep.subr.bf16.mxu0 %v360
    %422 = vmatpush1.bf16.msra.mxu0 %v359
    %423 = vmatprep.subr.bf16.mxu0 %v364
    %424 = vmatpush1.bf16.msra.mxu0 %v363
    %425 = vmatprep.subr.bf16.mxu0 %v368
    %426 = vmatpush1.bf16.msra.mxu0 %v367
    %427 = vmatprep.subr.bf16.mxu0 %v372
    %428 = vmatpush1.bf16.msra.mxu0 %v371
    %429 = vmatprep.subr.bf16.mxu0 %v376
    %430 = vmatpush1.bf16.msra.mxu0 %v375
    %431 = vmatprep.subr.bf16.mxu0 %v380
    %432 = vmatpush1.bf16.msra.mxu0 %v379
    %433 = vmatprep.subr.bf16.mxu0 %v384
    %434 = vmatpush1.bf16.msra.mxu0 %v383
    %435 = vmatprep.subr.bf16.mxu0 0
    %436 = vmatpush1.bf16.msra.mxu0 0
    %437 = vmatprep.subr.bf16.mxu0 0
    %438 = vmatpush1.bf16.msra.mxu0 0
    %439 = vmatprep.subr.bf16.mxu0 0
    %440 = vmatpush1.bf16.msra.mxu0 0
    %441 = vmatprep.subr.bf16.mxu0 0
    %442 = vmatpush1.bf16.msra.mxu0 0
    %443 = vmatprep.subr.bf16.mxu0 0
    %444 = vmatpush1.bf16.msra.mxu0 0
    %445 = vmatprep.subr.bf16.mxu0 0
    %446 = vmatpush1.bf16.msra.mxu0 0
    %447 = vmatprep.subr.bf16.mxu0 0
    %448 = vmatpush1.bf16.msra.mxu0 0
    %449 = vmatprep.subr.bf16.mxu0 0
    %450 = vmatpush1.bf16.msra.mxu0 0
    %451 = vmatprep.mubr.bf16.mxu0 0
    %452 = vmatmul.mubr.bf16.gmra.mrb[0].mxu0 %v204
    %v453 = vpop.f32.mrb[0].mxu0
    %v454 = vadd.f32 %v242, %v453
    %v455 = vpop.f32.mrb[0].mxu0
    %v456 = vadd.f32 %v246, %v455
    %v457 = vpop.f32.mrb[0].mxu0
    %v458 = vadd.f32 %v242, %v457
    %v459 = vpop.f32.mrb[0].mxu0
    %v460 = vadd.f32 %v246, %v459
    %461 = vdwg.mxu0
    %462 = vmatprep.subr.bf16.mxu0 %v358
    %463 = vmatpush1.bf16.msra.mxu0 %v357
    %464 = vmatprep.subr.bf16.mxu0 %v362
    %465 = vmatpush1.bf16.msra.mxu0 %v361
    %466 = vmatprep.subr.bf16.mxu0 %v366
    %467 = vmatpush1.bf16.msra.mxu0 %v365
    %468 = vmatprep.subr.bf16.mxu0 %v370
    %469 = vmatpush1.bf16.msra.mxu0 %v369
    %470 = vmatprep.subr.bf16.mxu0 %v374
    %471 = vmatpush1.bf16.msra.mxu0 %v373
    %472 = vmatprep.subr.bf16.mxu0 %v378
    %473 = vmatpush1.bf16.msra.mxu0 %v377
    %474 = vmatprep.subr.bf16.mxu0 %v382
    %475 = vmatpush1.bf16.msra.mxu0 %v381
    %476 = vmatprep.subr.bf16.mxu0 %v386
    %477 = vmatpush1.bf16.msra.mxu0 %v385
    %478 = vmatprep.subr.bf16.mxu0 0
    %479 = vmatpush1.bf16.msra.mxu0 0
    %480 = vmatprep.subr.bf16.mxu0 0
    %481 = vmatpush1.bf16.msra.mxu0 0
    %482 = vmatprep.subr.bf16.mxu0 0
    %483 = vmatpush1.bf16.msra.mxu0 0
    %484 = vmatprep.subr.bf16.mxu0 0
    %485 = vmatpush1.bf16.msra.mxu0 0
    %486 = vmatprep.subr.bf16.mxu0 0
    %487 = vmatpush1.bf16.msra.mxu0 0
    %488 = vmatprep.subr.bf16.mxu0 0
    %489 = vmatpush1.bf16.msra.mxu0 0
    %490 = vmatprep.subr.bf16.mxu0 0
    %491 = vmatpush1.bf16.msra.mxu0 0
    %492 = vmatprep.subr.bf16.mxu0 0
    %493 = vmatpush1.bf16.msra.mxu0 0
    %494 = vmatprep.mubr.bf16.mxu0 0
    %495 = vmatmul.mubr.bf16.gmra.mrb[0].mxu0 %v204
    %v496 = vpop.f32.mrb[0].mxu0
    %v497 = vadd.f32 %v250, %v496
    %v498 = vpop.f32.mrb[0].mxu0
    %v499 = vadd.f32 %v254, %v498
    %v500 = vpop.f32.mrb[0].mxu0
    %v501 = vadd.f32 %v250, %v500
    %v502 = vpop.f32.mrb[0].mxu0
    %v503 = vadd.f32 %v254, %v502
    %504 = vdwg.mxu0
    %vm505 = vcmp.gt.f32.partialorder %v454, 0.0
    %vm506 = vcmp.gt.f32.partialorder %v456, 0.0
    %vm507 = vcmp.gt.f32.partialorder %v497, 0.0
    %vm508 = vcmp.gt.f32.partialorder %v499, 0.0
    %vm509 = vcmp.gt.f32.partialorder %v458, 0.0
    %vm510 = vcmp.gt.f32.partialorder %v460, 0.0
    %vm511 = vcmp.gt.f32.partialorder %v501, 0.0
    %vm512 = vcmp.gt.f32.partialorder %v503, 0.0
    %v513 = vmul.f32 %v454, 0.1
    %v514 = vmul.f32 %v456, 0.1
    %v515 = vmul.f32 %v497, 0.1
    %v516 = vmul.f32 %v499, 0.1
    %v517 = vmul.f32 %v458, 0.1
    %v518 = vmul.f32 %v460, 0.1
    %v519 = vmul.f32 %v501, 0.1
    %v520 = vmul.f32 %v503, 0.1
    %v521 = vsel %vm505, %v454, %v513
    %v522 = vsel %vm506, %v456, %v514
    %v523 = vsel %vm507, %v497, %v515
    %v524 = vsel %vm508, %v499, %v516
    %v525 = vsel %vm509, %v458, %v517
    %v526 = vsel %vm510, %v460, %v518
    %v527 = vsel %vm511, %v501, %v519
    %v528 = vsel %vm512, %v503, %v520
    %v529 = vpack.c.bf16 %v525, %v521
    %v530 = vpack.c.bf16 %v526, %v522
    %v531 = vpack.c.bf16 %v527, %v523
    %v532 = vpack.c.bf16 %v528, %v524
    %v533 = vld [vmem:[#allocation8] sm:$0xff]
    %v534 = vld [vmem:[#allocation8 + $0x8] sm:$0xff]
    %v535 = vld [vmem:[#allocation8 + $0x10] sm:$0xff]
    %v536 = vld [vmem:[#allocation8 + $0x18] sm:$0xff]
    %v537 = vld [vmem:[#allocation8 + $0x20] sm:$0xff]
    %v538 = vld [vmem:[#allocation8 + $0x28] sm:$0xff]
    %v539 = vld [vmem:[#allocation8 + $0x30] sm:$0xff]
    %v540 = vld [vmem:[#allocation8 + $0x38] sm:$0xff]
    %v541 = vld [vmem:[#allocation8 + $0x40] sm:$0xff]
    %v542 = vld [vmem:[#allocation8 + $0x48] sm:$0xff]
    %v543 = vld [vmem:[#allocation8 + $0x50] sm:$0xff]
    %v544 = vld [vmem:[#allocation8 + $0x58] sm:$0xff]
    %v545 = vld [vmem:[#allocation8 + $0x60] sm:$0xff]
    %v546 = vld [vmem:[#allocation8 + $0x68] sm:$0xff]
    %v547 = vld [vmem:[#allocation8 + $0x70] sm:$0xff]
    %v548 = vld [vmem:[#allocation8 + $0x78] sm:$0xff]
    %v549 = vld [vmem:[#allocation8 + $0x80] sm:$0xff]
    %v550 = vld [vmem:[#allocation8 + $0x88] sm:$0xff]
    %v551 = vld [vmem:[#allocation8 + $0x90] sm:$0xff]
    %v552 = vld [vmem:[#allocation8 + $0x98] sm:$0xff]
    %v553 = vld [vmem:[#allocation8 + $0xa0] sm:$0xff]
    %v554 = vld [vmem:[#allocation8 + $0xa8] sm:$0xff]
    %v555 = vld [vmem:[#allocation8 + $0xb0] sm:$0xff]
    %v556 = vld [vmem:[#allocation8 + $0xb8] sm:$0xff]
    %v557 = vld [vmem:[#allocation8 + $0xc0] sm:$0xff]
    %v558 = vld [vmem:[#allocation8 + $0xc8] sm:$0xff]
    %v559 = vld [vmem:[#allocation8 + $0xd0] sm:$0xff]
    %v560 = vld [vmem:[#allocation8 + $0xd8] sm:$0xff]
    %v561 = vld [vmem:[#allocation8 + $0xe0] sm:$0xff]
    %v562 = vld [vmem:[#allocation8 + $0xe8] sm:$0xff]
    %v563 = vld [vmem:[#allocation8 + $0xf0] sm:$0xff]
    %v564 = vld [vmem:[#allocation8 + $0xf8] sm:$0xff]
    %v565 = vld [vmem:[#allocation8 + $0x100] sm:$0xff]
    %v566 = vld [vmem:[#allocation8 + $0x108] sm:$0xff]
    %v567 = vld [vmem:[#allocation8 + $0x110] sm:$0xff]
    %v568 = vld [vmem:[#allocation8 + $0x118] sm:$0xff]
    %v569 = vld [vmem:[#allocation8 + $0x120] sm:$0xff]
    %v570 = vld [vmem:[#allocation8 + $0x128] sm:$0xff]
    %v571 = vld [vmem:[#allocation8 + $0x130] sm:$0xff]
    %v572 = vld [vmem:[#allocation8 + $0x138] sm:$0xff]
    %v573 = vld [vmem:[#allocation8 + $0x140] sm:$0xff]
    %v574 = vld [vmem:[#allocation8 + $0x148] sm:$0xff]
    %v575 = vld [vmem:[#allocation8 + $0x150] sm:$0xff]
    %v576 = vld [vmem:[#allocation8 + $0x158] sm:$0xff]
    %v577 = vld [vmem:[#allocation8 + $0x160] sm:$0xff]
    %v578 = vld [vmem:[#allocation8 + $0x168] sm:$0xff]
    %v579 = vld [vmem:[#allocation8 + $0x170] sm:$0xff]
    %v580 = vld [vmem:[#allocation8 + $0x178] sm:$0xff]
    %v581 = vld [vmem:[#allocation8 + $0x180] sm:$0xff]
    %v582 = vld [vmem:[#allocation8 + $0x188] sm:$0xff]
    %v583 = vld [vmem:[#allocation8 + $0x190] sm:$0xff]
    %v584 = vld [vmem:[#allocation8 + $0x198] sm:$0xff]
    %v585 = vld [vmem:[#allocation8 + $0x1a0] sm:$0xff]
    %v586 = vld [vmem:[#allocation8 + $0x1a8] sm:$0xff]
    %v587 = vld [vmem:[#allocation8 + $0x1b0] sm:$0xff]
    %v588 = vld [vmem:[#allocation8 + $0x1b8] sm:$0xff]
    %v589 = vld [vmem:[#allocation8 + $0x1c0] sm:$0xff]
    %v590 = vld [vmem:[#allocation8 + $0x1c8] sm:$0xff]
    %v591 = vld [vmem:[#allocation8 + $0x1d0] sm:$0xff]
    %v592 = vld [vmem:[#allocation8 + $0x1d8] sm:$0xff]
    %v593 = vld [vmem:[#allocation8 + $0x1e0] sm:$0xff]
    %v594 = vld [vmem:[#allocation8 + $0x1e8] sm:$0xff]
    %v595 = vld [vmem:[#allocation8 + $0x1f0] sm:$0xff]
    %v596 = vld [vmem:[#allocation8 + $0x1f8] sm:$0xff]
    %v597 = vld [vmem:[#allocation8 + $0x200] sm:$0xff]
    %v598 = vld [vmem:[#allocation8 + $0x208] sm:$0xff]
    %v599 = vld [vmem:[#allocation8 + $0x210] sm:$0xff]
    %v600 = vld [vmem:[#allocation8 + $0x218] sm:$0xff]
    %v601 = vld [vmem:[#allocation8 + $0x220] sm:$0xff]
    %v602 = vld [vmem:[#allocation8 + $0x228] sm:$0xff]
    %v603 = vld [vmem:[#allocation8 + $0x230] sm:$0xff]
    %v604 = vld [vmem:[#allocation8 + $0x238] sm:$0xff]
    %v605 = vld [vmem:[#allocation8 + $0x240] sm:$0xff]
    %v606 = vld [vmem:[#allocation8 + $0x248] sm:$0xff]
    %v607 = vld [vmem:[#allocation8 + $0x250] sm:$0xff]
    %v608 = vld [vmem:[#allocation8 + $0x258] sm:$0xff]
    %v609 = vld [vmem:[#allocation8 + $0x260] sm:$0xff]
    %v610 = vld [vmem:[#allocation8 + $0x268] sm:$0xff]
    %v611 = vld [vmem:[#allocation8 + $0x270] sm:$0xff]
    %v612 = vld [vmem:[#allocation8 + $0x278] sm:$0xff]
    %v613 = vld [vmem:[#allocation8 + $0x280] sm:$0xff]
    %v614 = vld [vmem:[#allocation8 + $0x288] sm:$0xff]
    %v615 = vld [vmem:[#allocation8 + $0x290] sm:$0xff]
    %v616 = vld [vmem:[#allocation8 + $0x298] sm:$0xff]
    %v617 = vld [vmem:[#allocation8 + $0x2a0] sm:$0xff]
    %v618 = vld [vmem:[#allocation8 + $0x2a8] sm:$0xff]
    %v619 = vld [vmem:[#allocation8 + $0x2b0] sm:$0xff]
    %v620 = vld [vmem:[#allocation8 + $0x2b8] sm:$0xff]
    %v621 = vld [vmem:[#allocation8 + $0x2c0] sm:$0xff]
    %v622 = vld [vmem:[#allocation8 + $0x2c8] sm:$0xff]
    %v623 = vld [vmem:[#allocation8 + $0x2d0] sm:$0xff]
    %v624 = vld [vmem:[#allocation8 + $0x2d8] sm:$0xff]
    %v625 = vld [vmem:[#allocation8 + $0x2e0] sm:$0xff]
    %v626 = vld [vmem:[#allocation8 + $0x2e8] sm:$0xff]
    %v627 = vld [vmem:[#allocation8 + $0x2f0] sm:$0xff]
    %v628 = vld [vmem:[#allocation8 + $0x2f8] sm:$0xff]
    %v629 = vld [vmem:[#allocation8 + $0x300] sm:$0xff]
    %v630 = vld [vmem:[#allocation8 + $0x308] sm:$0xff]
    %v631 = vld [vmem:[#allocation8 + $0x310] sm:$0xff]
    %v632 = vld [vmem:[#allocation8 + $0x318] sm:$0xff]
    %v633 = vld [vmem:[#allocation8 + $0x320] sm:$0xff]
    %v634 = vld [vmem:[#allocation8 + $0x328] sm:$0xff]
    %v635 = vld [vmem:[#allocation8 + $0x330] sm:$0xff]
    %v636 = vld [vmem:[#allocation8 + $0x338] sm:$0xff]
    %v637 = vld [vmem:[#allocation8 + $0x340] sm:$0xff]
    %v638 = vld [vmem:[#allocation8 + $0x348] sm:$0xff]
    %v639 = vld [vmem:[#allocation8 + $0x350] sm:$0xff]
    %v640 = vld [vmem:[#allocation8 + $0x358] sm:$0xff]
    %v641 = vld [vmem:[#allocation8 + $0x360] sm:$0xff]
    %v642 = vld [vmem:[#allocation8 + $0x368] sm:$0xff]
    %v643 = vld [vmem:[#allocation8 + $0x370] sm:$0xff]
    %v644 = vld [vmem:[#allocation8 + $0x378] sm:$0xff]
    %v645 = vld [vmem:[#allocation8 + $0x380] sm:$0xff]
    %v646 = vld [vmem:[#allocation8 + $0x388] sm:$0xff]
    %v647 = vld [vmem:[#allocation8 + $0x390] sm:$0xff]
    %v648 = vld [vmem:[#allocation8 + $0x398] sm:$0xff]
    %v649 = vld [vmem:[#allocation8 + $0x3a0] sm:$0xff]
    %v650 = vld [vmem:[#allocation8 + $0x3a8] sm:$0xff]
    %v651 = vld [vmem:[#allocation8 + $0x3b0] sm:$0xff]
    %v652 = vld [vmem:[#allocation8 + $0x3b8] sm:$0xff]
    %v653 = vld [vmem:[#allocation8 + $0x3c0] sm:$0xff]
    %v654 = vld [vmem:[#allocation8 + $0x3c8] sm:$0xff]
    %v655 = vld [vmem:[#allocation8 + $0x3d0] sm:$0xff]
    %v656 = vld [vmem:[#allocation8 + $0x3d8] sm:$0xff]
    %v657 = vld [vmem:[#allocation8 + $0x3e0] sm:$0xff]
    %v658 = vld [vmem:[#allocation8 + $0x3e8] sm:$0xff]
    %v659 = vld [vmem:[#allocation8 + $0x3f0] sm:$0xff]
    %v660 = vld [vmem:[#allocation8 + $0x3f8] sm:$0xff]
    %v661 = vld [vmem:[#allocation8 + $0x400] sm:$0xff]
    %v662 = vld [vmem:[#allocation8 + $0x408] sm:$0xff]
    %v663 = vld [vmem:[#allocation8 + $0x410] sm:$0xff]
    %v664 = vld [vmem:[#allocation8 + $0x418] sm:$0xff]
    %v665 = vld [vmem:[#allocation8 + $0x420] sm:$0xff]
    %v666 = vld [vmem:[#allocation8 + $0x428] sm:$0xff]
    %v667 = vld [vmem:[#allocation8 + $0x430] sm:$0xff]
    %v668 = vld [vmem:[#allocation8 + $0x438] sm:$0xff]
    %v669 = vld [vmem:[#allocation8 + $0x440] sm:$0xff]
    %v670 = vld [vmem:[#allocation8 + $0x448] sm:$0xff]
    %v671 = vld [vmem:[#allocation8 + $0x450] sm:$0xff]
    %v672 = vld [vmem:[#allocation8 + $0x458] sm:$0xff]
    %v673 = vld [vmem:[#allocation8 + $0x460] sm:$0xff]
    %v674 = vld [vmem:[#allocation8 + $0x468] sm:$0xff]
    %v675 = vld [vmem:[#allocation8 + $0x470] sm:$0xff]
    %v676 = vld [vmem:[#allocation8 + $0x478] sm:$0xff]
    %v677 = vld [vmem:[#allocation8 + $0x480] sm:$0xff]
    %v678 = vld [vmem:[#allocation8 + $0x488] sm:$0xff]
    %v679 = vld [vmem:[#allocation8 + $0x490] sm:$0xff]
    %v680 = vld [vmem:[#allocation8 + $0x498] sm:$0xff]
    %v681 = vld [vmem:[#allocation8 + $0x4a0] sm:$0xff]
    %v682 = vld [vmem:[#allocation8 + $0x4a8] sm:$0xff]
    %v683 = vld [vmem:[#allocation8 + $0x4b0] sm:$0xff]
    %v684 = vld [vmem:[#allocation8 + $0x4b8] sm:$0xff]
    %v685 = vld [vmem:[#allocation8 + $0x4c0] sm:$0xff]
    %v686 = vld [vmem:[#allocation8 + $0x4c8] sm:$0xff]
    %v687 = vld [vmem:[#allocation8 + $0x4d0] sm:$0xff]
    %v688 = vld [vmem:[#allocation8 + $0x4d8] sm:$0xff]
    %v689 = vld [vmem:[#allocation8 + $0x4e0] sm:$0xff]
    %v690 = vld [vmem:[#allocation8 + $0x4e8] sm:$0xff]
    %v691 = vld [vmem:[#allocation8 + $0x4f0] sm:$0xff]
    %v692 = vld [vmem:[#allocation8 + $0x4f8] sm:$0xff]
    %v693 = vld [vmem:[#allocation8 + $0x500] sm:$0xff]
    %v694 = vld [vmem:[#allocation8 + $0x508] sm:$0xff]
    %v695 = vld [vmem:[#allocation8 + $0x510] sm:$0xff]
    %v696 = vld [vmem:[#allocation8 + $0x518] sm:$0xff]
    %v697 = vld [vmem:[#allocation8 + $0x520] sm:$0xff]
    %v698 = vld [vmem:[#allocation8 + $0x528] sm:$0xff]
    %v699 = vld [vmem:[#allocation8 + $0x530] sm:$0xff]
    %v700 = vld [vmem:[#allocation8 + $0x538] sm:$0xff]
    %v701 = vld [vmem:[#allocation8 + $0x540] sm:$0xff]
    %v702 = vld [vmem:[#allocation8 + $0x548] sm:$0xff]
    %v703 = vld [vmem:[#allocation8 + $0x550] sm:$0xff]
    %v704 = vld [vmem:[#allocation8 + $0x558] sm:$0xff]
    %v705 = vld [vmem:[#allocation8 + $0x560] sm:$0xff]
    %v706 = vld [vmem:[#allocation8 + $0x568] sm:$0xff]
    %v707 = vld [vmem:[#allocation8 + $0x570] sm:$0xff]
    %v708 = vld [vmem:[#allocation8 + $0x578] sm:$0xff]
    %v709 = vld [vmem:[#allocation8 + $0x580] sm:$0xff]
    %v710 = vld [vmem:[#allocation8 + $0x588] sm:$0xff]
    %v711 = vld [vmem:[#allocation8 + $0x590] sm:$0xff]
    %v712 = vld [vmem:[#allocation8 + $0x598] sm:$0xff]
    %v713 = vld [vmem:[#allocation8 + $0x5a0] sm:$0xff]
    %v714 = vld [vmem:[#allocation8 + $0x5a8] sm:$0xff]
    %v715 = vld [vmem:[#allocation8 + $0x5b0] sm:$0xff]
    %v716 = vld [vmem:[#allocation8 + $0x5b8] sm:$0xff]
    %v717 = vld [vmem:[#allocation8 + $0x5c0] sm:$0xff]
    %v718 = vld [vmem:[#allocation8 + $0x5c8] sm:$0xff]
    %v719 = vld [vmem:[#allocation8 + $0x5d0] sm:$0xff]
    %v720 = vld [vmem:[#allocation8 + $0x5d8] sm:$0xff]
    %v721 = vld [vmem:[#allocation8 + $0x5e0] sm:$0xff]
    %v722 = vld [vmem:[#allocation8 + $0x5e8] sm:$0xff]
    %v723 = vld [vmem:[#allocation8 + $0x5f0] sm:$0xff]
    %v724 = vld [vmem:[#allocation8 + $0x5f8] sm:$0xff]
    %v725 = vld [vmem:[%s6] sm:$0x3f]
    %v727 = vlaneseq
    %v728 = vshrl.u32 %v727, 7
    %v729 = vsub.s32 0, %v728
    %v730 = vrot.slane %v725, %v729
    %v731 = vlaneseq
    %v732 = vshrl.u32 %v731, 7
    %v733 = vsub.s32 1, %v732
    %v734 = vrot.slane %v725, %v733
    %v735 = vlaneseq
    %v736 = vshrl.u32 %v735, 7
    %v737 = vsub.s32 2, %v736
    %v738 = vrot.slane %v725, %v737
    %v739 = vlaneseq
    %v740 = vshrl.u32 %v739, 7
    %v741 = vsub.s32 3, %v740
    %v742 = vrot.slane %v725, %v741
    %v743 = vlaneseq
    %v744 = vshrl.u32 %v743, 7
    %v745 = vsub.s32 4, %v744
    %v746 = vrot.slane %v725, %v745
    %v747 = vlaneseq
    %v748 = vshrl.u32 %v747, 7
    %v749 = vsub.s32 5, %v748
    %v750 = vrot.slane %v725, %v749
    %v949 = vunpack.c.l.b16 %v533
    %v950 = vunpack.c.h.b16 %v533
    %v951 = vunpack.c.l.b16 %v534
    %v952 = vunpack.c.h.b16 %v534
    %v953 = vunpack.c.l.b16 %v535
    %v954 = vunpack.c.h.b16 %v535
    %v955 = vunpack.c.l.b16 %v536
    %v956 = vunpack.c.h.b16 %v536
    %v957 = vunpack.c.l.b16 %v537
    %v958 = vunpack.c.h.b16 %v537
    %v959 = vunpack.c.l.b16 %v538
    %v960 = vunpack.c.h.b16 %v538
    %v961 = vunpack.c.l.b16 %v539
    %v962 = vunpack.c.h.b16 %v539
    %v963 = vunpack.c.l.b16 %v540
    %v964 = vunpack.c.h.b16 %v540
    %v965 = vunpack.c.l.b16 %v541
    %v966 = vunpack.c.h.b16 %v541
    %v967 = vunpack.c.l.b16 %v542
    %v968 = vunpack.c.h.b16 %v542
    %v969 = vunpack.c.l.b16 %v543
    %v970 = vunpack.c.h.b16 %v543
    %v971 = vunpack.c.l.b16 %v544
    %v972 = vunpack.c.h.b16 %v544
    %v973 = vunpack.c.l.b16 %v545
    %v974 = vunpack.c.h.b16 %v545
    %v975 = vunpack.c.l.b16 %v546
    %v976 = vunpack.c.h.b16 %v546
    %v977 = vunpack.c.l.b16 %v547
    %v978 = vunpack.c.h.b16 %v547
    %v979 = vunpack.c.l.b16 %v548
    %v980 = vunpack.c.h.b16 %v548
    %v981 = vunpack.c.l.b16 %v549
    %v982 = vunpack.c.h.b16 %v549
    %v983 = vunpack.c.l.b16 %v550
    %v984 = vunpack.c.h.b16 %v550
    %v985 = vunpack.c.l.b16 %v551
    %v986 = vunpack.c.h.b16 %v551
    %v987 = vunpack.c.l.b16 %v552
    %v988 = vunpack.c.h.b16 %v552
    %v989 = vunpack.c.l.b16 %v553
    %v990 = vunpack.c.h.b16 %v553
    %v991 = vunpack.c.l.b16 %v554
    %v992 = vunpack.c.h.b16 %v554
    %v993 = vunpack.c.l.b16 %v555
    %v994 = vunpack.c.h.b16 %v555
    %v995 = vunpack.c.l.b16 %v556
    %v996 = vunpack.c.h.b16 %v556
    %v997 = vunpack.c.l.b16 %v557
    %v998 = vunpack.c.h.b16 %v557
    %v999 = vunpack.c.l.b16 %v558
    %v1000 = vunpack.c.h.b16 %v558
    %v1001 = vunpack.c.l.b16 %v559
    %v1002 = vunpack.c.h.b16 %v559
    %v1003 = vunpack.c.l.b16 %v560
    %v1004 = vunpack.c.h.b16 %v560
    %v1005 = vunpack.c.l.b16 %v561
    %v1006 = vunpack.c.h.b16 %v561
    %v1007 = vunpack.c.l.b16 %v562
    %v1008 = vunpack.c.h.b16 %v562
    %v1009 = vunpack.c.l.b16 %v563
    %v1010 = vunpack.c.h.b16 %v563
    %v1011 = vunpack.c.l.b16 %v564
    %v1012 = vunpack.c.h.b16 %v564
    %v1013 = vunpack.c.l.b16 %v565
    %v1014 = vunpack.c.h.b16 %v565
    %v1015 = vunpack.c.l.b16 %v566
    %v1016 = vunpack.c.h.b16 %v566
    %v1017 = vunpack.c.l.b16 %v567
    %v1018 = vunpack.c.h.b16 %v567
    %v1019 = vunpack.c.l.b16 %v568
    %v1020 = vunpack.c.h.b16 %v568
    %v1021 = vunpack.c.l.b16 %v569
    %v1022 = vunpack.c.h.b16 %v569
    %v1023 = vunpack.c.l.b16 %v570
    %v1024 = vunpack.c.h.b16 %v570
    %v1025 = vunpack.c.l.b16 %v571
    %v1026 = vunpack.c.h.b16 %v571
    %v1027 = vunpack.c.l.b16 %v572
    %v1028 = vunpack.c.h.b16 %v572
    %v1029 = vunpack.c.l.b16 %v573
    %v1030 = vunpack.c.h.b16 %v573
    %v1031 = vunpack.c.l.b16 %v574
    %v1032 = vunpack.c.h.b16 %v574
    %v1033 = vunpack.c.l.b16 %v575
    %v1034 = vunpack.c.h.b16 %v575
    %v1035 = vunpack.c.l.b16 %v576
    %v1036 = vunpack.c.h.b16 %v576
    %v1037 = vunpack.c.l.b16 %v577
    %v1038 = vunpack.c.h.b16 %v577
    %v1039 = vunpack.c.l.b16 %v578
    %v1040 = vunpack.c.h.b16 %v578
    %v1041 = vunpack.c.l.b16 %v579
    %v1042 = vunpack.c.h.b16 %v579
    %v1043 = vunpack.c.l.b16 %v580
    %v1044 = vunpack.c.h.b16 %v580
    %v1045 = vunpack.c.l.b16 %v581
    %v1046 = vunpack.c.h.b16 %v581
    %v1047 = vunpack.c.l.b16 %v582
    %v1048 = vunpack.c.h.b16 %v582
    %v1049 = vunpack.c.l.b16 %v583
    %v1050 = vunpack.c.h.b16 %v583
    %v1051 = vunpack.c.l.b16 %v584
    %v1052 = vunpack.c.h.b16 %v584
    %v1053 = vunpack.c.l.b16 %v585
    %v1054 = vunpack.c.h.b16 %v585
    %v1055 = vunpack.c.l.b16 %v586
    %v1056 = vunpack.c.h.b16 %v586
    %v1057 = vunpack.c.l.b16 %v587
    %v1058 = vunpack.c.h.b16 %v587
    %v1059 = vunpack.c.l.b16 %v588
    %v1060 = vunpack.c.h.b16 %v588
    %v1061 = vunpack.c.l.b16 %v589
    %v1062 = vunpack.c.h.b16 %v589
    %v1063 = vunpack.c.l.b16 %v590
    %v1064 = vunpack.c.h.b16 %v590
    %v1065 = vunpack.c.l.b16 %v591
    %v1066 = vunpack.c.h.b16 %v591
    %v1067 = vunpack.c.l.b16 %v592
    %v1068 = vunpack.c.h.b16 %v592
    %v1069 = vunpack.c.l.b16 %v593
    %v1070 = vunpack.c.h.b16 %v593
    %v1071 = vunpack.c.l.b16 %v594
    %v1072 = vunpack.c.h.b16 %v594
    %v1073 = vunpack.c.l.b16 %v595
    %v1074 = vunpack.c.h.b16 %v595
    %v1075 = vunpack.c.l.b16 %v596
    %v1076 = vunpack.c.h.b16 %v596
    %v1077 = vunpack.c.l.b16 %v597
    %v1078 = vunpack.c.h.b16 %v597
    %v1079 = vunpack.c.l.b16 %v598
    %v1080 = vunpack.c.h.b16 %v598
    %v1081 = vunpack.c.l.b16 %v599
    %v1082 = vunpack.c.h.b16 %v599
    %v1083 = vunpack.c.l.b16 %v600
    %v1084 = vunpack.c.h.b16 %v600
    %v1085 = vunpack.c.l.b16 %v601
    %v1086 = vunpack.c.h.b16 %v601
    %v1087 = vunpack.c.l.b16 %v602
    %v1088 = vunpack.c.h.b16 %v602
    %v1089 = vunpack.c.l.b16 %v603
    %v1090 = vunpack.c.h.b16 %v603
    %v1091 = vunpack.c.l.b16 %v604
    %v1092 = vunpack.c.h.b16 %v604
    %v1093 = vunpack.c.l.b16 %v605
    %v1094 = vunpack.c.h.b16 %v605
    %v1095 = vunpack.c.l.b16 %v606
    %v1096 = vunpack.c.h.b16 %v606
    %v1097 = vunpack.c.l.b16 %v607
    %v1098 = vunpack.c.h.b16 %v607
    %v1099 = vunpack.c.l.b16 %v608
    %v1100 = vunpack.c.h.b16 %v608
    %v1101 = vunpack.c.l.b16 %v609
    %v1102 = vunpack.c.h.b16 %v609
    %v1103 = vunpack.c.l.b16 %v610
    %v1104 = vunpack.c.h.b16 %v610
    %v1105 = vunpack.c.l.b16 %v611
    %v1106 = vunpack.c.h.b16 %v611
    %v1107 = vunpack.c.l.b16 %v612
    %v1108 = vunpack.c.h.b16 %v612
    %v1109 = vunpack.c.l.b16 %v613
    %v1110 = vunpack.c.h.b16 %v613
    %v1111 = vunpack.c.l.b16 %v614
    %v1112 = vunpack.c.h.b16 %v614
    %v1113 = vunpack.c.l.b16 %v615
    %v1114 = vunpack.c.h.b16 %v615
    %v1115 = vunpack.c.l.b16 %v616
    %v1116 = vunpack.c.h.b16 %v616
    %v1117 = vunpack.c.l.b16 %v617
    %v1118 = vunpack.c.h.b16 %v617
    %v1119 = vunpack.c.l.b16 %v618
    %v1120 = vunpack.c.h.b16 %v618
    %v1121 = vunpack.c.l.b16 %v619
    %v1122 = vunpack.c.h.b16 %v619
    %v1123 = vunpack.c.l.b16 %v620
    %v1124 = vunpack.c.h.b16 %v620
    %v1125 = vunpack.c.l.b16 %v621
    %v1126 = vunpack.c.h.b16 %v621
    %v1127 = vunpack.c.l.b16 %v622
    %v1128 = vunpack.c.h.b16 %v622
    %v1129 = vunpack.c.l.b16 %v623
    %v1130 = vunpack.c.h.b16 %v623
    %v1131 = vunpack.c.l.b16 %v624
    %v1132 = vunpack.c.h.b16 %v624
    %v1133 = vunpack.c.l.b16 %v625
    %v1134 = vunpack.c.h.b16 %v625
    %v1135 = vunpack.c.l.b16 %v626
    %v1136 = vunpack.c.h.b16 %v626
    %v1137 = vunpack.c.l.b16 %v627
    %v1138 = vunpack.c.h.b16 %v627
    %v1139 = vunpack.c.l.b16 %v628
    %v1140 = vunpack.c.h.b16 %v628
    %v1141 = vunpack.c.l.b16 %v629
    %v1142 = vunpack.c.h.b16 %v629
    %v1143 = vunpack.c.l.b16 %v630
    %v1144 = vunpack.c.h.b16 %v630
    %v1145 = vunpack.c.l.b16 %v631
    %v1146 = vunpack.c.h.b16 %v631
    %v1147 = vunpack.c.l.b16 %v632
    %v1148 = vunpack.c.h.b16 %v632
    %v1149 = vunpack.c.l.b16 %v633
    %v1150 = vunpack.c.h.b16 %v633
    %v1151 = vunpack.c.l.b16 %v634
    %v1152 = vunpack.c.h.b16 %v634
    %v1153 = vunpack.c.l.b16 %v635
    %v1154 = vunpack.c.h.b16 %v635
    %v1155 = vunpack.c.l.b16 %v636
    %v1156 = vunpack.c.h.b16 %v636
    %v1157 = vunpack.c.l.b16 %v637
    %v1158 = vunpack.c.h.b16 %v637
    %v1159 = vunpack.c.l.b16 %v638
    %v1160 = vunpack.c.h.b16 %v638
    %v1161 = vunpack.c.l.b16 %v639
    %v1162 = vunpack.c.h.b16 %v639
    %v1163 = vunpack.c.l.b16 %v640
    %v1164 = vunpack.c.h.b16 %v640
    %v1165 = vunpack.c.l.b16 %v641
    %v1166 = vunpack.c.h.b16 %v641
    %v1167 = vunpack.c.l.b16 %v642
    %v1168 = vunpack.c.h.b16 %v642
    %v1169 = vunpack.c.l.b16 %v643
    %v1170 = vunpack.c.h.b16 %v643
    %v1171 = vunpack.c.l.b16 %v644
    %v1172 = vunpack.c.h.b16 %v644
    %v1173 = vunpack.c.l.b16 %v645
    %v1174 = vunpack.c.h.b16 %v645
    %v1175 = vunpack.c.l.b16 %v646
    %v1176 = vunpack.c.h.b16 %v646
    %v1177 = vunpack.c.l.b16 %v647
    %v1178 = vunpack.c.h.b16 %v647
    %v1179 = vunpack.c.l.b16 %v648
    %v1180 = vunpack.c.h.b16 %v648
    %v1181 = vunpack.c.l.b16 %v649
    %v1182 = vunpack.c.h.b16 %v649
    %v1183 = vunpack.c.l.b16 %v650
    %v1184 = vunpack.c.h.b16 %v650
    %v1185 = vunpack.c.l.b16 %v651
    %v1186 = vunpack.c.h.b16 %v651
    %v1187 = vunpack.c.l.b16 %v652
    %v1188 = vunpack.c.h.b16 %v652
    %v1189 = vunpack.c.l.b16 %v653
    %v1190 = vunpack.c.h.b16 %v653
    %v1191 = vunpack.c.l.b16 %v654
    %v1192 = vunpack.c.h.b16 %v654
    %v1193 = vunpack.c.l.b16 %v655
    %v1194 = vunpack.c.h.b16 %v655
    %v1195 = vunpack.c.l.b16 %v656
    %v1196 = vunpack.c.h.b16 %v656
    %v1197 = vunpack.c.l.b16 %v657
    %v1198 = vunpack.c.h.b16 %v657
    %v1199 = vunpack.c.l.b16 %v658
    %v1200 = vunpack.c.h.b16 %v658
    %v1201 = vunpack.c.l.b16 %v659
    %v1202 = vunpack.c.h.b16 %v659
    %v1203 = vunpack.c.l.b16 %v660
    %v1204 = vunpack.c.h.b16 %v660
    %v1205 = vunpack.c.l.b16 %v661
    %v1206 = vunpack.c.h.b16 %v661
    %v1207 = vunpack.c.l.b16 %v662
    %v1208 = vunpack.c.h.b16 %v662
    %v1209 = vunpack.c.l.b16 %v663
    %v1210 = vunpack.c.h.b16 %v663
    %v1211 = vunpack.c.l.b16 %v664
    %v1212 = vunpack.c.h.b16 %v664
    %v1213 = vunpack.c.l.b16 %v665
    %v1214 = vunpack.c.h.b16 %v665
    %v1215 = vunpack.c.l.b16 %v666
    %v1216 = vunpack.c.h.b16 %v666
    %v1217 = vunpack.c.l.b16 %v667
    %v1218 = vunpack.c.h.b16 %v667
    %v1219 = vunpack.c.l.b16 %v668
    %v1220 = vunpack.c.h.b16 %v668
    %v1221 = vunpack.c.l.b16 %v669
    %v1222 = vunpack.c.h.b16 %v669
    %v1223 = vunpack.c.l.b16 %v670
    %v1224 = vunpack.c.h.b16 %v670
    %v1225 = vunpack.c.l.b16 %v671
    %v1226 = vunpack.c.h.b16 %v671
    %v1227 = vunpack.c.l.b16 %v672
    %v1228 = vunpack.c.h.b16 %v672
    %v1229 = vunpack.c.l.b16 %v673
    %v1230 = vunpack.c.h.b16 %v673
    %v1231 = vunpack.c.l.b16 %v674
    %v1232 = vunpack.c.h.b16 %v674
    %v1233 = vunpack.c.l.b16 %v675
    %v1234 = vunpack.c.h.b16 %v675
    %v1235 = vunpack.c.l.b16 %v676
    %v1236 = vunpack.c.h.b16 %v676
    %v1237 = vunpack.c.l.b16 %v677
    %v1238 = vunpack.c.h.b16 %v677
    %v1239 = vunpack.c.l.b16 %v678
    %v1240 = vunpack.c.h.b16 %v678
    %v1241 = vunpack.c.l.b16 %v679
    %v1242 = vunpack.c.h.b16 %v679
    %v1243 = vunpack.c.l.b16 %v680
    %v1244 = vunpack.c.h.b16 %v680
    %v1245 = vunpack.c.l.b16 %v681
    %v1246 = vunpack.c.h.b16 %v681
    %v1247 = vunpack.c.l.b16 %v682
    %v1248 = vunpack.c.h.b16 %v682
    %v1249 = vunpack.c.l.b16 %v683
    %v1250 = vunpack.c.h.b16 %v683
    %v1251 = vunpack.c.l.b16 %v684
    %v1252 = vunpack.c.h.b16 %v684
    %v1253 = vunpack.c.l.b16 %v685
    %v1254 = vunpack.c.h.b16 %v685
    %v1255 = vunpack.c.l.b16 %v686
    %v1256 = vunpack.c.h.b16 %v686
    %v1257 = vunpack.c.l.b16 %v687
    %v1258 = vunpack.c.h.b16 %v687
    %v1259 = vunpack.c.l.b16 %v688
    %v1260 = vunpack.c.h.b16 %v688
    %v1261 = vunpack.c.l.b16 %v689
    %v1262 = vunpack.c.h.b16 %v689
    %v1263 = vunpack.c.l.b16 %v690
    %v1264 = vunpack.c.h.b16 %v690
    %v1265 = vunpack.c.l.b16 %v691
    %v1266 = vunpack.c.h.b16 %v691
    %v1267 = vunpack.c.l.b16 %v692
    %v1268 = vunpack.c.h.b16 %v692
    %v1269 = vunpack.c.l.b16 %v693
    %v1270 = vunpack.c.h.b16 %v693
    %v1271 = vunpack.c.l.b16 %v694
    %v1272 = vunpack.c.h.b16 %v694
    %v1273 = vunpack.c.l.b16 %v695
    %v1274 = vunpack.c.h.b16 %v695
    %v1275 = vunpack.c.l.b16 %v696
    %v1276 = vunpack.c.h.b16 %v696
    %v1277 = vunpack.c.l.b16 %v697
    %v1278 = vunpack.c.h.b16 %v697
    %v1279 = vunpack.c.l.b16 %v698
    %v1280 = vunpack.c.h.b16 %v698
    %v1281 = vunpack.c.l.b16 %v699
    %v1282 = vunpack.c.h.b16 %v699
    %v1283 = vunpack.c.l.b16 %v700
    %v1284 = vunpack.c.h.b16 %v700
    %v1285 = vunpack.c.l.b16 %v701
    %v1286 = vunpack.c.h.b16 %v701
    %v1287 = vunpack.c.l.b16 %v702
    %v1288 = vunpack.c.h.b16 %v702
    %v1289 = vunpack.c.l.b16 %v703
    %v1290 = vunpack.c.h.b16 %v703
    %v1291 = vunpack.c.l.b16 %v704
    %v1292 = vunpack.c.h.b16 %v704
    %v1293 = vunpack.c.l.b16 %v705
    %v1294 = vunpack.c.h.b16 %v705
    %v1295 = vunpack.c.l.b16 %v706
    %v1296 = vunpack.c.h.b16 %v706
    %v1297 = vunpack.c.l.b16 %v707
    %v1298 = vunpack.c.h.b16 %v707
    %v1299 = vunpack.c.l.b16 %v708
    %v1300 = vunpack.c.h.b16 %v708
    %v1301 = vunpack.c.l.b16 %v709
    %v1302 = vunpack.c.h.b16 %v709
    %v1303 = vunpack.c.l.b16 %v710
    %v1304 = vunpack.c.h.b16 %v710
    %v1305 = vunpack.c.l.b16 %v711
    %v1306 = vunpack.c.h.b16 %v711
    %v1307 = vunpack.c.l.b16 %v712
    %v1308 = vunpack.c.h.b16 %v712
    %v1309 = vunpack.c.l.b16 %v713
    %v1310 = vunpack.c.h.b16 %v713
    %v1311 = vunpack.c.l.b16 %v714
    %v1312 = vunpack.c.h.b16 %v714
    %v1313 = vunpack.c.l.b16 %v715
    %v1314 = vunpack.c.h.b16 %v715
    %v1315 = vunpack.c.l.b16 %v716
    %v1316 = vunpack.c.h.b16 %v716
    %v1317 = vunpack.c.l.b16 %v717
    %v1318 = vunpack.c.h.b16 %v717
    %v1319 = vunpack.c.l.b16 %v718
    %v1320 = vunpack.c.h.b16 %v718
    %v1321 = vunpack.c.l.b16 %v719
    %v1322 = vunpack.c.h.b16 %v719
    %v1323 = vunpack.c.l.b16 %v720
    %v1324 = vunpack.c.h.b16 %v720
    %v1325 = vunpack.c.l.b16 %v721
    %v1326 = vunpack.c.h.b16 %v721
    %v1327 = vunpack.c.l.b16 %v722
    %v1328 = vunpack.c.h.b16 %v722
    %v1329 = vunpack.c.l.b16 %v723
    %v1330 = vunpack.c.h.b16 %v723
    %v1331 = vunpack.c.l.b16 %v724
    %v1332 = vunpack.c.h.b16 %v724
    %v1333 = vpack.c.b16 %v955, %v949
    %v1334 = vpack.c.b16 %v956, %v950
    %v1335 = vpack.c.b16 %v957, %v951
    %v1336 = vpack.c.b16 %v958, %v952
    %v1337 = vpack.c.b16 %v959, %v953
    %v1338 = vpack.c.b16 %v960, %v954
    %v1339 = vpack.c.b16 %v967, %v961
    %v1340 = vpack.c.b16 %v968, %v962
    %v1341 = vpack.c.b16 %v969, %v963
    %v1342 = vpack.c.b16 %v970, %v964
    %v1343 = vpack.c.b16 %v971, %v965
    %v1344 = vpack.c.b16 %v972, %v966
    %v1345 = vpack.c.b16 %v979, %v973
    %v1346 = vpack.c.b16 %v980, %v974
    %v1347 = vpack.c.b16 %v981, %v975
    %v1348 = vpack.c.b16 %v982, %v976
    %v1349 = vpack.c.b16 %v983, %v977
    %v1350 = vpack.c.b16 %v984, %v978
    %v1351 = vpack.c.b16 %v991, %v985
    %v1352 = vpack.c.b16 %v992, %v986
    %v1353 = vpack.c.b16 %v993, %v987
    %v1354 = vpack.c.b16 %v994, %v988
    %v1355 = vpack.c.b16 %v995, %v989
    %v1356 = vpack.c.b16 %v996, %v990
    %v1357 = vpack.c.b16 %v1003, %v997
    %v1358 = vpack.c.b16 %v1004, %v998
    %v1359 = vpack.c.b16 %v1005, %v999
    %v1360 = vpack.c.b16 %v1006, %v1000
    %v1361 = vpack.c.b16 %v1007, %v1001
    %v1362 = vpack.c.b16 %v1008, %v1002
    %v1363 = vpack.c.b16 %v1015, %v1009
    %v1364 = vpack.c.b16 %v1016, %v1010
    %v1365 = vpack.c.b16 %v1017, %v1011
    %v1366 = vpack.c.b16 %v1018, %v1012
    %v1367 = vpack.c.b16 %v1019, %v1013
    %v1368 = vpack.c.b16 %v1020, %v1014
    %v1369 = vpack.c.b16 %v1027, %v1021
    %v1370 = vpack.c.b16 %v1028, %v1022
    %v1371 = vpack.c.b16 %v1029, %v1023
    %v1372 = vpack.c.b16 %v1030, %v1024
    %v1373 = vpack.c.b16 %v1031, %v1025
    %v1374 = vpack.c.b16 %v1032, %v1026
    %v1375 = vpack.c.b16 %v1039, %v1033
    %v1376 = vpack.c.b16 %v1040, %v1034
    %v1377 = vpack.c.b16 %v1041, %v1035
    %v1378 = vpack.c.b16 %v1042, %v1036
    %v1379 = vpack.c.b16 %v1043, %v1037
    %v1380 = vpack.c.b16 %v1044, %v1038
    %v1381 = vpack.c.b16 %v1051, %v1045
    %v1382 = vpack.c.b16 %v1052, %v1046
    %v1383 = vpack.c.b16 %v1053, %v1047
    %v1384 = vpack.c.b16 %v1054, %v1048
    %v1385 = vpack.c.b16 %v1055, %v1049
    %v1386 = vpack.c.b16 %v1056, %v1050
    %v1387 = vpack.c.b16 %v1063, %v1057
    %v1388 = vpack.c.b16 %v1064, %v1058
    %v1389 = vpack.c.b16 %v1065, %v1059
    %v1390 = vpack.c.b16 %v1066, %v1060
    %v1391 = vpack.c.b16 %v1067, %v1061
    %v1392 = vpack.c.b16 %v1068, %v1062
    %v1393 = vpack.c.b16 %v1075, %v1069
    %v1394 = vpack.c.b16 %v1076, %v1070
    %v1395 = vpack.c.b16 %v1077, %v1071
    %v1396 = vpack.c.b16 %v1078, %v1072
    %v1397 = vpack.c.b16 %v1079, %v1073
    %v1398 = vpack.c.b16 %v1080, %v1074
    %v1399 = vpack.c.b16 %v1087, %v1081
    %v1400 = vpack.c.b16 %v1088, %v1082
    %v1401 = vpack.c.b16 %v1089, %v1083
    %v1402 = vpack.c.b16 %v1090, %v1084
    %v1403 = vpack.c.b16 %v1091, %v1085
    %v1404 = vpack.c.b16 %v1092, %v1086
    %v1405 = vpack.c.b16 %v1099, %v1093
    %v1406 = vpack.c.b16 %v1100, %v1094
    %v1407 = vpack.c.b16 %v1101, %v1095
    %v1408 = vpack.c.b16 %v1102, %v1096
    %v1409 = vpack.c.b16 %v1103, %v1097
    %v1410 = vpack.c.b16 %v1104, %v1098
    %v1411 = vpack.c.b16 %v1111, %v1105
    %v1412 = vpack.c.b16 %v1112, %v1106
    %v1413 = vpack.c.b16 %v1113, %v1107
    %v1414 = vpack.c.b16 %v1114, %v1108
    %v1415 = vpack.c.b16 %v1115, %v1109
    %v1416 = vpack.c.b16 %v1116, %v1110
    %v1417 = vpack.c.b16 %v1123, %v1117
    %v1418 = vpack.c.b16 %v1124, %v1118
    %v1419 = vpack.c.b16 %v1125, %v1119
    %v1420 = vpack.c.b16 %v1126, %v1120
    %v1421 = vpack.c.b16 %v1127, %v1121
    %v1422 = vpack.c.b16 %v1128, %v1122
    %v1423 = vpack.c.b16 %v1135, %v1129
    %v1424 = vpack.c.b16 %v1136, %v1130
    %v1425 = vpack.c.b16 %v1137, %v1131
    %v1426 = vpack.c.b16 %v1138, %v1132
    %v1427 = vpack.c.b16 %v1139, %v1133
    %v1428 = vpack.c.b16 %v1140, %v1134
    %v1429 = vpack.c.b16 %v1147, %v1141
    %v1430 = vpack.c.b16 %v1148, %v1142
    %v1431 = vpack.c.b16 %v1149, %v1143
    %v1432 = vpack.c.b16 %v1150, %v1144
    %v1433 = vpack.c.b16 %v1151, %v1145
    %v1434 = vpack.c.b16 %v1152, %v1146
    %v1435 = vpack.c.b16 %v1159, %v1153
    %v1436 = vpack.c.b16 %v1160, %v1154
    %v1437 = vpack.c.b16 %v1161, %v1155
    %v1438 = vpack.c.b16 %v1162, %v1156
    %v1439 = vpack.c.b16 %v1163, %v1157
    %v1440 = vpack.c.b16 %v1164, %v1158
    %v1441 = vpack.c.b16 %v1171, %v1165
    %v1442 = vpack.c.b16 %v1172, %v1166
    %v1443 = vpack.c.b16 %v1173, %v1167
    %v1444 = vpack.c.b16 %v1174, %v1168
    %v1445 = vpack.c.b16 %v1175, %v1169
    %v1446 = vpack.c.b16 %v1176, %v1170
    %v1447 = vpack.c.b16 %v1183, %v1177
    %v1448 = vpack.c.b16 %v1184, %v1178
    %v1449 = vpack.c.b16 %v1185, %v1179
    %v1450 = vpack.c.b16 %v1186, %v1180
    %v1451 = vpack.c.b16 %v1187, %v1181
    %v1452 = vpack.c.b16 %v1188, %v1182
    %v1453 = vpack.c.b16 %v1195, %v1189
    %v1454 = vpack.c.b16 %v1196, %v1190
    %v1455 = vpack.c.b16 %v1197, %v1191
    %v1456 = vpack.c.b16 %v1198, %v1192
    %v1457 = vpack.c.b16 %v1199, %v1193
    %v1458 = vpack.c.b16 %v1200, %v1194
    %v1459 = vpack.c.b16 %v1207, %v1201
    %v1460 = vpack.c.b16 %v1208, %v1202
    %v1461 = vpack.c.b16 %v1209, %v1203
    %v1462 = vpack.c.b16 %v1210, %v1204
    %v1463 = vpack.c.b16 %v1211, %v1205
    %v1464 = vpack.c.b16 %v1212, %v1206
    %v1465 = vpack.c.b16 %v1219, %v1213
    %v1466 = vpack.c.b16 %v1220, %v1214
    %v1467 = vpack.c.b16 %v1221, %v1215
    %v1468 = vpack.c.b16 %v1222, %v1216
    %v1469 = vpack.c.b16 %v1223, %v1217
    %v1470 = vpack.c.b16 %v1224, %v1218
    %v1471 = vpack.c.b16 %v1231, %v1225
    %v1472 = vpack.c.b16 %v1232, %v1226
    %v1473 = vpack.c.b16 %v1233, %v1227
    %v1474 = vpack.c.b16 %v1234, %v1228
    %v1475 = vpack.c.b16 %v1235, %v1229
    %v1476 = vpack.c.b16 %v1236, %v1230
    %v1477 = vpack.c.b16 %v1243, %v1237
    %v1478 = vpack.c.b16 %v1244, %v1238
    %v1479 = vpack.c.b16 %v1245, %v1239
    %v1480 = vpack.c.b16 %v1246, %v1240
    %v1481 = vpack.c.b16 %v1247, %v1241
    %v1482 = vpack.c.b16 %v1248, %v1242
    %v1483 = vpack.c.b16 %v1255, %v1249
    %v1484 = vpack.c.b16 %v1256, %v1250
    %v1485 = vpack.c.b16 %v1257, %v1251
    %v1486 = vpack.c.b16 %v1258, %v1252
    %v1487 = vpack.c.b16 %v1259, %v1253
    %v1488 = vpack.c.b16 %v1260, %v1254
    %v1489 = vpack.c.b16 %v1267, %v1261
    %v1490 = vpack.c.b16 %v1268, %v1262
    %v1491 = vpack.c.b16 %v1269, %v1263
    %v1492 = vpack.c.b16 %v1270, %v1264
    %v1493 = vpack.c.b16 %v1271, %v1265
    %v1494 = vpack.c.b16 %v1272, %v1266
    %v1495 = vpack.c.b16 %v1279, %v1273
    %v1496 = vpack.c.b16 %v1280, %v1274
    %v1497 = vpack.c.b16 %v1281, %v1275
    %v1498 = vpack.c.b16 %v1282, %v1276
    %v1499 = vpack.c.b16 %v1283, %v1277
    %v1500 = vpack.c.b16 %v1284, %v1278
    %v1501 = vpack.c.b16 %v1291, %v1285
    %v1502 = vpack.c.b16 %v1292, %v1286
    %v1503 = vpack.c.b16 %v1293, %v1287
    %v1504 = vpack.c.b16 %v1294, %v1288
    %v1505 = vpack.c.b16 %v1295, %v1289
    %v1506 = vpack.c.b16 %v1296, %v1290
    %v1507 = vpack.c.b16 %v1303, %v1297
    %v1508 = vpack.c.b16 %v1304, %v1298
    %v1509 = vpack.c.b16 %v1305, %v1299
    %v1510 = vpack.c.b16 %v1306, %v1300
    %v1511 = vpack.c.b16 %v1307, %v1301
    %v1512 = vpack.c.b16 %v1308, %v1302
    %v1513 = vpack.c.b16 %v1315, %v1309
    %v1514 = vpack.c.b16 %v1316, %v1310
    %v1515 = vpack.c.b16 %v1317, %v1311
    %v1516 = vpack.c.b16 %v1318, %v1312
    %v1517 = vpack.c.b16 %v1319, %v1313
    %v1518 = vpack.c.b16 %v1320, %v1314
    %v1519 = vpack.c.b16 %v1327, %v1321
    %v1520 = vpack.c.b16 %v1328, %v1322
    %v1521 = vpack.c.b16 %v1329, %v1323
    %v1522 = vpack.c.b16 %v1330, %v1324
    %v1523 = vpack.c.b16 %v1331, %v1325
    %v1524 = vpack.c.b16 %v1332, %v1326
    %1717 = vmatprep.subr.bf16.mxu0 %v1334
    %1718 = vmatpush1.bf16.msra.mxu0 %v1333
    %1719 = vmatprep.subr.bf16.mxu0 %v1340
    %1720 = vmatpush1.bf16.msra.mxu0 %v1339
    %1721 = vmatprep.subr.bf16.mxu0 %v1346
    %1722 = vmatpush1.bf16.msra.mxu0 %v1345
    %1723 = vmatprep.subr.bf16.mxu0 %v1352
    %1724 = vmatpush1.bf16.msra.mxu0 %v1351
    %1725 = vmatprep.subr.bf16.mxu0 %v1358
    %1726 = vmatpush1.bf16.msra.mxu0 %v1357
    %1727 = vmatprep.subr.bf16.mxu0 %v1364
    %1728 = vmatpush1.bf16.msra.mxu0 %v1363
    %1729 = vmatprep.subr.bf16.mxu0 %v1370
    %1730 = vmatpush1.bf16.msra.mxu0 %v1369
    %1731 = vmatprep.subr.bf16.mxu0 %v1376
    %1732 = vmatpush1.bf16.msra.mxu0 %v1375
    %1733 = vmatprep.subr.bf16.mxu0 %v1382
    %1734 = vmatpush1.bf16.msra.mxu0 %v1381
    %1735 = vmatprep.subr.bf16.mxu0 %v1388
    %1736 = vmatpush1.bf16.msra.mxu0 %v1387
    %1737 = vmatprep.subr.bf16.mxu0 %v1394
    %1738 = vmatpush1.bf16.msra.mxu0 %v1393
    %1739 = vmatprep.subr.bf16.mxu0 %v1400
    %1740 = vmatpush1.bf16.msra.mxu0 %v1399
    %1741 = vmatprep.subr.bf16.mxu0 %v1406
    %1742 = vmatpush1.bf16.msra.mxu0 %v1405
    %1743 = vmatprep.subr.bf16.mxu0 %v1412
    %1744 = vmatpush1.bf16.msra.mxu0 %v1411
    %1745 = vmatprep.subr.bf16.mxu0 %v1418
    %1746 = vmatpush1.bf16.msra.mxu0 %v1417
    %1747 = vmatprep.subr.bf16.mxu0 %v1424
    %1748 = vmatpush1.bf16.msra.mxu0 %v1423
    %1749 = vmatprep.mubr.bf16.mxu0 %v530
    %1750 = vmatmul.mubr.bf16.gmra.mrb[0].mxu0 %v529
    %v1751 = vpop.f32.mrb[0].mxu0
    %v1752 = vadd.f32 %v730, %v1751
    %v1753 = vpop.f32.mrb[0].mxu0
    %v1754 = vadd.f32 %v734, %v1753
    %v1755 = vpop.f32.mrb[0].mxu0
    %v1756 = vadd.f32 %v730, %v1755
    %v1757 = vpop.f32.mrb[0].mxu0
    %v1758 = vadd.f32 %v734, %v1757
    %1759 = vdwg.mxu0
    %1760 = vmatprep.subr.bf16.mxu0 %v1430
    %1761 = vmatpush1.bf16.msra.mxu0 %v1429
    %1762 = vmatprep.subr.bf16.mxu0 %v1436
    %1763 = vmatpush1.bf16.msra.mxu0 %v1435
    %1764 = vmatprep.subr.bf16.mxu0 %v1442
    %1765 = vmatpush1.bf16.msra.mxu0 %v1441
    %1766 = vmatprep.subr.bf16.mxu0 %v1448
    %1767 = vmatpush1.bf16.msra.mxu0 %v1447
    %1768 = vmatprep.subr.bf16.mxu0 %v1454
    %1769 = vmatpush1.bf16.msra.mxu0 %v1453
    %1770 = vmatprep.subr.bf16.mxu0 %v1460
    %1771 = vmatpush1.bf16.msra.mxu0 %v1459
    %1772 = vmatprep.subr.bf16.mxu0 %v1466
    %1773 = vmatpush1.bf16.msra.mxu0 %v1465
    %1774 = vmatprep.subr.bf16.mxu0 %v1472
    %1775 = vmatpush1.bf16.msra.mxu0 %v1471
    %1776 = vmatprep.subr.bf16.mxu0 %v1478
    %1777 = vmatpush1.bf16.msra.mxu0 %v1477
    %1778 = vmatprep.subr.bf16.mxu0 %v1484
    %1779 = vmatpush1.bf16.msra.mxu0 %v1483
    %1780 = vmatprep.subr.bf16.mxu0 %v1490
    %1781 = vmatpush1.bf16.msra.mxu0 %v1489
    %1782 = vmatprep.subr.bf16.mxu0 %v1496
    %1783 = vmatpush1.bf16.msra.mxu0 %v1495
    %1784 = vmatprep.subr.bf16.mxu0 %v1502
    %1785 = vmatpush1.bf16.msra.mxu0 %v1501
    %1786 = vmatprep.subr.bf16.mxu0 %v1508
    %1787 = vmatpush1.bf16.msra.mxu0 %v1507
    %1788 = vmatprep.subr.bf16.mxu0 %v1514
    %1789 = vmatpush1.bf16.msra.mxu0 %v1513
    %1790 = vmatprep.subr.bf16.mxu0 %v1520
    %1791 = vmatpush1.bf16.msra.mxu0 %v1519
    %1792 = vmatprep.mubr.bf16.mxu0 %v532
    %1793 = vmatmul.mubr.bf16.gmra.mrb[0].mxu0 %v531
    %v1794 = vpop.f32.mrb[0].mxu0
    %v1795 = vadd.f32 %v1752, %v1794
    %v1796 = vpop.f32.mrb[0].mxu0
    %v1797 = vadd.f32 %v1754, %v1796
    %v1798 = vpop.f32.mrb[0].mxu0
    %v1799 = vadd.f32 %v1756, %v1798
    %v1800 = vpop.f32.mrb[0].mxu0
    %v1801 = vadd.f32 %v1758, %v1800
    %1802 = vdwg.mxu0
    %1803 = vmatprep.subr.bf16.mxu0 %v1336
    %1804 = vmatpush1.bf16.msra.mxu0 %v1335
    %1805 = vmatprep.subr.bf16.mxu0 %v1342
    %1806 = vmatpush1.bf16.msra.mxu0 %v1341
    %1807 = vmatprep.subr.bf16.mxu0 %v1348
    %1808 = vmatpush1.bf16.msra.mxu0 %v1347
    %1809 = vmatprep.subr.bf16.mxu0 %v1354
    %1810 = vmatpush1.bf16.msra.mxu0 %v1353
    %1811 = vmatprep.subr.bf16.mxu0 %v1360
    %1812 = vmatpush1.bf16.msra.mxu0 %v1359
    %1813 = vmatprep.subr.bf16.mxu0 %v1366
    %1814 = vmatpush1.bf16.msra.mxu0 %v1365
    %1815 = vmatprep.subr.bf16.mxu0 %v1372
    %1816 = vmatpush1.bf16.msra.mxu0 %v1371
    %1817 = vmatprep.subr.bf16.mxu0 %v1378
    %1818 = vmatpush1.bf16.msra.mxu0 %v1377
    %1819 = vmatprep.subr.bf16.mxu0 %v1384
    %1820 = vmatpush1.bf16.msra.mxu0 %v1383
    %1821 = vmatprep.subr.bf16.mxu0 %v1390
    %1822 = vmatpush1.bf16.msra.mxu0 %v1389
    %1823 = vmatprep.subr.bf16.mxu0 %v1396
    %1824 = vmatpush1.bf16.msra.mxu0 %v1395
    %1825 = vmatprep.subr.bf16.mxu0 %v1402
    %1826 = vmatpush1.bf16.msra.mxu0 %v1401
    %1827 = vmatprep.subr.bf16.mxu0 %v1408
    %1828 = vmatpush1.bf16.msra.mxu0 %v1407
    %1829 = vmatprep.subr.bf16.mxu0 %v1414
    %1830 = vmatpush1.bf16.msra.mxu0 %v1413
    %1831 = vmatprep.subr.bf16.mxu0 %v1420
    %1832 = vmatpush1.bf16.msra.mxu0 %v1419
    %1833 = vmatprep.subr.bf16.mxu0 %v1426
    %1834 = vmatpush1.bf16.msra.mxu0 %v1425
    %1835 = vmatprep.mubr.bf16.mxu0 %v530
    %1836 = vmatmul.mubr.bf16.gmra.mrb[0].mxu0 %v529
    %v1837 = vpop.f32.mrb[0].mxu0
    %v1838 = vadd.f32 %v738, %v1837
    %v1839 = vpop.f32.mrb[0].mxu0
    %v1840 = vadd.f32 %v742, %v1839
    %v1841 = vpop.f32.mrb[0].mxu0
    %v1842 = vadd.f32 %v738, %v1841
    %v1843 = vpop.f32.mrb[0].mxu0
    %v1844 = vadd.f32 %v742, %v1843
    %1845 = vdwg.mxu0
    %1846 = vmatprep.subr.bf16.mxu0 %v1432
    %1847 = vmatpush1.bf16.msra.mxu0 %v1431
    %1848 = vmatprep.subr.bf16.mxu0 %v1438
    %1849 = vmatpush1.bf16.msra.mxu0 %v1437
    %1850 = vmatprep.subr.bf16.mxu0 %v1444
    %1851 = vmatpush1.bf16.msra.mxu0 %v1443
    %1852 = vmatprep.subr.bf16.mxu0 %v1450
    %1853 = vmatpush1.bf16.msra.mxu0 %v1449
    %1854 = vmatprep.subr.bf16.mxu0 %v1456
    %1855 = vmatpush1.bf16.msra.mxu0 %v1455
    %1856 = vmatprep.subr.bf16.mxu0 %v1462
    %1857 = vmatpush1.bf16.msra.mxu0 %v1461
    %1858 = vmatprep.subr.bf16.mxu0 %v1468
    %1859 = vmatpush1.bf16.msra.mxu0 %v1467
    %1860 = vmatprep.subr.bf16.mxu0 %v1474
    %1861 = vmatpush1.bf16.msra.mxu0 %v1473
    %1862 = vmatprep.subr.bf16.mxu0 %v1480
    %1863 = vmatpush1.bf16.msra.mxu0 %v1479
    %1864 = vmatprep.subr.bf16.mxu0 %v1486
    %1865 = vmatpush1.bf16.msra.mxu0 %v1485
    %1866 = vmatprep.subr.bf16.mxu0 %v1492
    %1867 = vmatpush1.bf16.msra.mxu0 %v1491
    %1868 = vmatprep.subr.bf16.mxu0 %v1498
    %1869 = vmatpush1.bf16.msra.mxu0 %v1497
    %1870 = vmatprep.subr.bf16.mxu0 %v1504
    %1871 = vmatpush1.bf16.msra.mxu0 %v1503
    %1872 = vmatprep.subr.bf16.mxu0 %v1510
    %1873 = vmatpush1.bf16.msra.mxu0 %v1509
    %1874 = vmatprep.subr.bf16.mxu0 %v1516
    %1875 = vmatpush1.bf16.msra.mxu0 %v1515
    %1876 = vmatprep.subr.bf16.mxu0 %v1522
    %1877 = vmatpush1.bf16.msra.mxu0 %v1521
    %1878 = vmatprep.mubr.bf16.mxu0 %v532
    %1879 = vmatmul.mubr.bf16.gmra.mrb[0].mxu0 %v531
    %v1880 = vpop.f32.mrb[0].mxu0
    %v1881 = vadd.f32 %v1838, %v1880
    %v1882 = vpop.f32.mrb[0].mxu0
    %v1883 = vadd.f32 %v1840, %v1882
    %v1884 = vpop.f32.mrb[0].mxu0
    %v1885 = vadd.f32 %v1842, %v1884
    %v1886 = vpop.f32.mrb[0].mxu0
    %v1887 = vadd.f32 %v1844, %v1886
    %1888 = vdwg.mxu0
    %1889 = vmatprep.subr.bf16.mxu0 %v1338
    %1890 = vmatpush1.bf16.msra.mxu0 %v1337
    %1891 = vmatprep.subr.bf16.mxu0 %v1344
    %1892 = vmatpush1.bf16.msra.mxu0 %v1343
    %1893 = vmatprep.subr.bf16.mxu0 %v1350
    %1894 = vmatpush1.bf16.msra.mxu0 %v1349
    %1895 = vmatprep.subr.bf16.mxu0 %v1356
    %1896 = vmatpush1.bf16.msra.mxu0 %v1355
    %1897 = vmatprep.subr.bf16.mxu0 %v1362
    %1898 = vmatpush1.bf16.msra.mxu0 %v1361
    %1899 = vmatprep.subr.bf16.mxu0 %v1368
    %1900 = vmatpush1.bf16.msra.mxu0 %v1367
    %1901 = vmatprep.subr.bf16.mxu0 %v1374
    %1902 = vmatpush1.bf16.msra.mxu0 %v1373
    %1903 = vmatprep.subr.bf16.mxu0 %v1380
    %1904 = vmatpush1.bf16.msra.mxu0 %v1379
    %1905 = vmatprep.subr.bf16.mxu0 %v1386
    %1906 = vmatpush1.bf16.msra.mxu0 %v1385
    %1907 = vmatprep.subr.bf16.mxu0 %v1392
    %1908 = vmatpush1.bf16.msra.mxu0 %v1391
    %1909 = vmatprep.subr.bf16.mxu0 %v1398
    %1910 = vmatpush1.bf16.msra.mxu0 %v1397
    %1911 = vmatprep.subr.bf16.mxu0 %v1404
    %1912 = vmatpush1.bf16.msra.mxu0 %v1403
    %1913 = vmatprep.subr.bf16.mxu0 %v1410
    %1914 = vmatpush1.bf16.msra.mxu0 %v1409
    %1915 = vmatprep.subr.bf16.mxu0 %v1416
    %1916 = vmatpush1.bf16.msra.mxu0 %v1415
    %1917 = vmatprep.subr.bf16.mxu0 %v1422
    %1918 = vmatpush1.bf16.msra.mxu0 %v1421
    %1919 = vmatprep.subr.bf16.mxu0 %v1428
    %1920 = vmatpush1.bf16.msra.mxu0 %v1427
    %1921 = vmatprep.mubr.bf16.mxu0 %v530
    %1922 = vmatmul.mubr.bf16.gmra.mrb[0].mxu0 %v529
    %v1923 = vpop.f32.mrb[0].mxu0
    %v1924 = vadd.f32 %v746, %v1923
    %v1925 = vpop.f32.mrb[0].mxu0
    %v1926 = vadd.f32 %v750, %v1925
    %v1927 = vpop.f32.mrb[0].mxu0
    %v1928 = vadd.f32 %v746, %v1927
    %v1929 = vpop.f32.mrb[0].mxu0
    %v1930 = vadd.f32 %v750, %v1929
    %1931 = vdwg.mxu0
    %1932 = vmatprep.subr.bf16.mxu0 %v1434
    %1933 = vmatpush1.bf16.msra.mxu0 %v1433
    %1934 = vmatprep.subr.bf16.mxu0 %v1440
    %1935 = vmatpush1.bf16.msra.mxu0 %v1439
    %1936 = vmatprep.subr.bf16.mxu0 %v1446
    %1937 = vmatpush1.bf16.msra.mxu0 %v1445
    %1938 = vmatprep.subr.bf16.mxu0 %v1452
    %1939 = vmatpush1.bf16.msra.mxu0 %v1451
    %1940 = vmatprep.subr.bf16.mxu0 %v1458
    %1941 = vmatpush1.bf16.msra.mxu0 %v1457
    %1942 = vmatprep.subr.bf16.mxu0 %v1464
    %1943 = vmatpush1.bf16.msra.mxu0 %v1463
    %1944 = vmatprep.subr.bf16.mxu0 %v1470
    %1945 = vmatpush1.bf16.msra.mxu0 %v1469
    %1946 = vmatprep.subr.bf16.mxu0 %v1476
    %1947 = vmatpush1.bf16.msra.mxu0 %v1475
    %1948 = vmatprep.subr.bf16.mxu0 %v1482
    %1949 = vmatpush1.bf16.msra.mxu0 %v1481
    %1950 = vmatprep.subr.bf16.mxu0 %v1488
    %1951 = vmatpush1.bf16.msra.mxu0 %v1487
    %1952 = vmatprep.subr.bf16.mxu0 %v1494
    %1953 = vmatpush1.bf16.msra.mxu0 %v1493
    %1954 = vmatprep.subr.bf16.mxu0 %v1500
    %1955 = vmatpush1.bf16.msra.mxu0 %v1499
    %1956 = vmatprep.subr.bf16.mxu0 %v1506
    %1957 = vmatpush1.bf16.msra.mxu0 %v1505
    %1958 = vmatprep.subr.bf16.mxu0 %v1512
    %1959 = vmatpush1.bf16.msra.mxu0 %v1511
    %1960 = vmatprep.subr.bf16.mxu0 %v1518
    %1961 = vmatpush1.bf16.msra.mxu0 %v1517
    %1962 = vmatprep.subr.bf16.mxu0 %v1524
    %1963 = vmatpush1.bf16.msra.mxu0 %v1523
    %1964 = vmatprep.mubr.bf16.mxu0 %v532
    %1965 = vmatmul.mubr.bf16.gmra.mrb[0].mxu0 %v531
    %v1966 = vpop.f32.mrb[0].mxu0
    %v1967 = vadd.f32 %v1924, %v1966
    %v1968 = vpop.f32.mrb[0].mxu0
    %v1969 = vadd.f32 %v1926, %v1968
    %v1970 = vpop.f32.mrb[0].mxu0
    %v1971 = vadd.f32 %v1928, %v1970
    %v1972 = vpop.f32.mrb[0].mxu0
    %v1973 = vadd.f32 %v1930, %v1972
    %1974 = vdwg.mxu0
    %1975 = vst [vmem:[#allocation10] sm:$0xff] %v1795
    %1976 = vst [vmem:[#allocation10 + $0x8] sm:$0xff] %v1797
    %1977 = vst [vmem:[#allocation10 + $0x10] sm:$0xff] %v1881
    %1978 = vst [vmem:[#allocation10 + $0x18] sm:$0xff] %v1883
    %1979 = vst [vmem:[#allocation10 + $0x20] sm:$0xff] %v1967
    %1980 = vst [vmem:[#allocation10 + $0x28] sm:$0xff] %v1969
    %1981 = vst [vmem:[#allocation10 + $0x30] sm:$0xff] %v1799
    %1982 = vst [vmem:[#allocation10 + $0x38] sm:$0xff] %v1801
    %1983 = vst [vmem:[#allocation10 + $0x40] sm:$0xff] %v1885
    %1984 = vst [vmem:[#allocation10 + $0x48] sm:$0xff] %v1887
    %1985 = vst [vmem:[#allocation10 + $0x50] sm:$0xff] %v1971
    %1986 = vst [vmem:[#allocation10 + $0x58] sm:$0xff] %v1973
    // Predicated region
    $region46: #{nnetwork_forward.1} parent=1 // pred_check
      _
    $region47: #{nnetwork_forward.1} parent=1 // pred_check_branch
      %1988 = sbr.rel (0) target = $region49
    $region48: #{nnetwork_forward.1} parent=1 // pred_region
      %s1990 = ssub.s32 1536, 1536
      %1991 = vsyncadd [#allocation4], %s1990
      %s1992 = sshll.u32 [#allocation10], 4
      %s1993 = int_to_ptr.vmem [resolvable:$true] %s1992
      %1998 = dma.vmem_to_hbm [thread:$0]  %s1993, 1536, %s7, [#allocation4], 768, 768, 48
    $region49: #{nnetwork_forward.1} parent=1 // pred_fallthru
      _
    // Predicated region
    $region50: #{nnetwork_forward.1} parent=1 // pred_check
      _
    $region51: #{nnetwork_forward.1} parent=1 // pred_check_branch
      %2000 = sbr.rel (0) target = $region53
    $region52: #{nnetwork_forward.1} parent=1 // pred_region
      %2001 = dma.done [#allocation4], 1536
    $region53: #{nnetwork_forward.1} parent=1 // pred_fallthru
      _
    %2002 = vsyncpa [#allocation3], 1
    %2003 = vsyncpa [#allocation6], 1
    %2004 = vsyncpa [#allocation9], 1
    %2005 = vsyncpa [#allocation4], 1

</llo_original>
